<compile_context>
chip_gen: v6e
topology: v6e:2x2x1
jax: 0.10.0
libtpu: 0.0.40
codegen_flags: <defaults>
</compile_context>

<pallas_src>
import functools

import jax
import jax.numpy as jnp
from jax.experimental import pallas as pl
from jax.experimental.pallas import tpu as pltpu

NUM_CLASS = 2          # num_class
HIDDEN = 2             # ggnn_hidden_channel
OUT_CH = 2             # ggnn_output_channel
TIME_STEP = 3
ATTR_NUM = 81
GRAPH_NUM = ATTR_NUM + NUM_CLASS   # 83 graph nodes
LANES = 128                        # node axis padded onto the 128-lane dim

# ---------------------------------------------------------------------------
# wslab row map (single small-weight slab, (48, 128) f32, zero padded):
#   rows 0..2   folded scene weight  (3,128)     rows 20..23 GRU U (z,r)   (4,2)
#   row  3      folded scene bias    (1,128)     rows 24..25 GRU U (cand)  (2,2)
#   row  4      reshape_input bias   (1,128)     rows 26..27 head W_h      (2,2)
#   row  5      reshape class row ch0(1,128)     rows 28..29 head W_x      (2,2)
#   row  6      reshape class row ch1(1,128)     rows 30..35 GRU gate bias (6,1)
#   row  7      classifier-1 bias    (1,128)     rows 36..37 head bias     (2,1)
#   rows 8..13  GRU W, A_in half     (6,2)       rows 38..39 classifier-2 W(2,1)
#   rows 14..19 GRU W, A_out half    (6,2)       row  40     classifier-2 b(1,1)
# ---------------------------------------------------------------------------
ROW_WFOLD, ROW_BFOLD, ROW_BRH, ROW_WE, ROW_WO, ROW_B1 = 0, 3, 4, 5, 6, 7
ROW_WIN, ROW_WOUT, ROW_UZR, ROW_U5 = 8, 14, 20, 24
ROW_WOH, ROW_WOX, ROW_BALL, ROW_BO, ROW_W2, ROW_B2 = 26, 28, 30, 36, 38, 40
WSLAB_ROWS = 48

# bigmat column map ((128, 640) f32):
#   [:,   0:256] [A_in^T | A_out^T]   (adjacency, 83 -> 128 padded)
#   [:, 256:512] [base_e | base_o]    (reshape_input object-node rows, ch0/ch1)
#   [:, 512:640] classifier Linear-1 weight (82x2, zero padded)
COL_ADJ = 0
COL_GATHER = 2 * LANES
COL_W1 = 4 * LANES
BIGMAT_COLS = 5 * LANES


# ---------------------------------------------------------------------------
# Fused forward kernel (no grid: runs once, everything resident in VMEM).
# Node states are TRANSPOSED: (channels, 128), lanes = graph nodes (83 valid).
# ---------------------------------------------------------------------------
def _gpa_fused_kernel(pooled_ref, x0_ref, wslab_ref, bigmat_ref, o_ref, *,
                      time_step, scene):
    f32 = jnp.float32
    H, L = HIDDEN, LANES

    ws = wslab_ref[...]                       # (48,128): every tiny weight, one load

    # ---------------- contextual input (transposed, (HIDDEN, 128)) ----------
    x0 = x0_ref[...]
    if scene:
        # TODO(synk): resnet_scene (pretrained Places365 ResNet) has no clean
        # Pallas equivalent; replaced by channel-GAP(full_im) -> Linear(3,365),
        # and that stub + scene_privacy_layer are folded offline into the
        # single (3,128) weight / (1,128) bias stored in wslab rows 0..3.
        brow = (jnp.dot(pooled_ref[...], ws[ROW_WFOLD:ROW_WFOLD + 3, :],
                        preferred_element_type=f32)
                + ws[ROW_BFOLD:ROW_BFOLD + 1, :])          # (1,128); lanes>=2 are 0
        x0 = jnp.concatenate([x0[0:1, :], x0[1:2, :] + brow], axis=0)

    # ---------------- GGNN propagation --------------------------------------
    # Gate weight columns as (k,1) values: the K=2 contractions are done with
    # VPU broadcast multiply-adds (no tiny MXU dots on the serial GRU chain).
    win0, win1 = ws[ROW_WIN:ROW_WIN + 6, 0:1], ws[ROW_WIN:ROW_WIN + 6, 1:2]
    wout0, wout1 = ws[ROW_WOUT:ROW_WOUT + 6, 0:1], ws[ROW_WOUT:ROW_WOUT + 6, 1:2]
    uzr0, uzr1 = ws[ROW_UZR:ROW_UZR + 4, 0:1], ws[ROW_UZR:ROW_UZR + 4, 1:2]
    u50, u51 = ws[ROW_U5:ROW_U5 + 2, 0:1], ws[ROW_U5:ROW_U5 + 2, 1:2]
    ball = ws[ROW_BALL:ROW_BALL + 6, 0:1]

    h = x0
    for _ in range(time_step):  # static trip count (3), unrolled at trace time
        # only the K=128 contraction stays on the MXU; the adjacency slice is
        # read at its use site to keep vreg pressure low
        msgs = jnp.dot(h, bigmat_ref[:, pl.ds(COL_ADJ, 2 * L)],
                       preferred_element_type=f32)                  # (2,256)
        mi0, mi1 = msgs[0:1, 0:L], msgs[1:2, 0:L]                   # A_in messages
        mo0, mo1 = msgs[0:1, L:2 * L], msgs[1:2, L:2 * L]           # A_out messages
        pre = win0 * mi0 + win1 * mi1 + wout0 * mo0 + wout1 * mo1 + ball  # (6,128)
        pu = uzr0 * h[0:1, :] + uzr1 * h[1:2, :]                          # (4,128)
        z = jax.nn.sigmoid(pre[0:H] + pu[0:H])                            # eq (3)
        r = jax.nn.sigmoid(pre[H:2 * H] + pu[H:2 * H])                    # eq (4)
        rh = r * h
        hc = jnp.tanh(pre[2 * H:3 * H] + u50 * rh[0:1, :] + u51 * rh[1:2, :])  # eq (5)
        h = (1.0 - z) * h + z * hc

    # output head on [h_T, h_0], also K=2 -> VPU
    woh0, woh1 = ws[ROW_WOH:ROW_WOH + 2, 0:1], ws[ROW_WOH:ROW_WOH + 2, 1:2]
    wox0, wox1 = ws[ROW_WOX:ROW_WOX + 2, 0:1], ws[ROW_WOX:ROW_WOX + 2, 1:2]
    bo = ws[ROW_BO:ROW_BO + 2, 0:1]
    out_t = jnp.tanh(woh0 * h[0:1, :] + woh1 * h[1:2, :]
                     + wox0 * x0[0:1, :] + wox1 * x0[1:2, :] + bo)        # (2,128)

    # -------- per-class gather + reshape_input ------------------------------
    # shared object-node term: ONE (2,128)@(128,256) dot against [base_e|base_o]
    gathered = jnp.dot(out_t, bigmat_ref[:, pl.ds(COL_GATHER, 2 * L)],
                       preferred_element_type=f32)                        # (2,256)
    shared = (gathered[0:1, 0:L] + gathered[1:2, L:2 * L]
              + ws[ROW_BRH:ROW_BRH + 1, :])                               # (1,128)
    # class-node contribution = rank-1 correction per class (VPU)
    we_row = ws[ROW_WE:ROW_WE + 1, :]
    wo_row = ws[ROW_WO:ROW_WO + 1, :]
    h1_0 = shared + out_t[0:1, 0:1] * we_row + out_t[1:2, 0:1] * wo_row
    h1_1 = shared + out_t[0:1, 1:2] * we_row + out_t[1:2, 1:2] * wo_row
    h1 = jnp.concatenate([h1_0, h1_1], axis=0)                            # (2,128)

    # ---------------- classifier (dropouts are identity) --------------------
    h2 = jnp.maximum(
        jnp.dot(h1, bigmat_ref[:, pl.ds(COL_W1, L)], preferred_element_type=f32)
        + ws[ROW_B1:ROW_B1 + 1, :], 0.0)                                  # (2,128)
    scores = (h2[:, 0:1] * ws[ROW_W2:ROW_W2 + 1, 0:1]
              + h2[:, 1:2] * ws[ROW_W2 + 1:ROW_W2 + 2, 0:1]
              + ws[ROW_B2:ROW_B2 + 1, 0:1])                               # (2,1)
    # lane-dense store; wrapper reads lane 0
    o_ref[...] = jnp.broadcast_to(scores, (NUM_CLASS, L))


# ---------------------------------------------------------------------------
# Deterministic parameter initialization (synthetic, no checkpoint loading).
# ---------------------------------------------------------------------------
def init_params(key):
    ks = jax.random.split(key, 16)
    p = {}

    def lin(k, fan_in, fan_out, std):
        return jax.random.normal(k, (fan_in, fan_out), jnp.float32) * std

    # adjacency (normally loaded from `adjacency_matrix` file) -- synthetic,
    # row-normalized so the synthetic demo does not saturate the GRU gates.
    adj = jax.random.uniform(ks[0], (GRAPH_NUM, GRAPH_NUM), jnp.float32) / GRAPH_NUM
    p["a_in"], p["a_out"] = adj, adj.T

    # GGNN GRU gates: torch Linear(2H, H) stored transposed, split in/out halves;
    # the two torch biases (fc_eqX_w.bias + fc_eqX_u.bias) folded into one.
    for name, (kw, ku) in zip(("3", "4", "5"), ((1, 2), (3, 4), (5, 6))):
        w = lin(ks[kw], 2 * HIDDEN, HIDDEN, 0.1)
        p[f"w{name}i"], p[f"w{name}o"] = w[:HIDDEN], w[HIDDEN:]
        p[f"u{name}"] = lin(ks[ku], HIDDEN, HIDDEN, 0.1)
        p[f"b{name}"] = jnp.zeros((1, HIDDEN), jnp.float32)

    wo = lin(ks[7], 2 * HIDDEN, OUT_CH, 0.1)
    p["woh"], p["wox"] = wo[:HIDDEN], wo[HIDDEN:]
    p["bo"] = jnp.zeros((1, OUT_CH), jnp.float32)

    # reshape_input: Linear((attr_num+1)*num_class, attr_num+1)
    p["wr"] = lin(ks[8], (ATTR_NUM + 1) * NUM_CLASS, ATTR_NUM + 1, 0.01)
    p["br"] = jnp.zeros((1, ATTR_NUM + 1), jnp.float32)

    # classifier (both Linears normal(0, 0.001), bias zero — matches the
    # cnt-reset bug in _initialize_weights)
    p["w1"] = lin(ks[9], ATTR_NUM + 1, NUM_CLASS, 0.001)
    p["b1"] = jnp.zeros((1, NUM_CLASS), jnp.float32)
    p["w2"] = lin(ks[10], NUM_CLASS, 1, 0.001)
    p["b2"] = jnp.zeros((1, 1), jnp.float32)

    # scene_privacy_layer: Linear(365, 2)
    p["wscene"] = lin(ks[11], 365, NUM_CLASS, 0.01)
    p["bscene"] = jnp.zeros((1, NUM_CLASS), jnp.float32)

    # stand-in projection for the (unimplemented) resnet_scene backbone
    p["wstub"] = lin(ks[12], 3, 365, 0.1)
    p["bstub"] = jnp.zeros((1, 365), jnp.float32)
    return p


# ---------------------------------------------------------------------------
# One-time weight preparation: fold / transpose / concatenate / zero-pad
# everything into the TWO slabs the fused kernel consumes.
# ---------------------------------------------------------------------------
def prepare_kernel_params(p):
    f32 = jnp.float32
    z = lambda *s: jnp.zeros(s, f32)
    L = LANES

    # ---- big matrix slab (128, 640) ----------------------------------------
    a_in_t = z(L, L).at[:GRAPH_NUM, :GRAPH_NUM].set(p["a_in"].T)
    a_out_t = z(L, L).at[:GRAPH_NUM, :GRAPH_NUM].set(p["a_out"].T)
    wr = p["wr"]                                   # (164, 82)
    wr_even, wr_odd = wr[0::2], wr[1::2]           # per-node ch0 / ch1 rows (82,82)
    # object-node rows only (class-node row handled as a rank-1 correction)
    base_e = z(L, L).at[NUM_CLASS:GRAPH_NUM, :ATTR_NUM + 1].set(wr_even[1:])
    base_o = z(L, L).at[NUM_CLASS:GRAPH_NUM, :ATTR_NUM + 1].set(wr_odd[1:])
    w1p = z(L, L).at[:ATTR_NUM + 1, :NUM_CLASS].set(p["w1"])
    bigmat = jnp.concatenate([a_in_t, a_out_t, base_e, base_o, w1p], axis=1)

    # ---- scene stub + scene_privacy_layer folded offline (both affine) -----
    wscene_big = z(365, L).at[:, :NUM_CLASS].set(p["wscene"])
    bscene_big = z(1, L).at[:, :NUM_CLASS].set(p["bscene"])
    w_fold = p["wstub"] @ wscene_big               # (3, 128)
    b_fold = p["bstub"] @ wscene_big + bscene_big  # (1, 128)

    # ---- small-weight slab (48, 128): every tiny weight/bias in ONE DMA ----
    win = jnp.concatenate([p["w3i"].T, p["w4i"].T, p["w5i"].T], axis=0)   # (6,2)
    wout = jnp.concatenate([p["w3o"].T, p["w4o"].T, p["w5o"].T], axis=0)  # (6,2)
    uzr = jnp.concatenate([p["u3"].T, p["u4"].T], axis=0)                 # (4,2)
    ball = jnp.concatenate([p["b3"].T, p["b4"].T, p["b5"].T], axis=0)     # (6,1)

    ws = z(WSLAB_ROWS, L)
    ws = ws.at[ROW_WFOLD:ROW_WFOLD + 3, :].set(w_fold)
    ws = ws.at[ROW_BFOLD, :].set(b_fold[0])
    ws = ws.at[ROW_BRH, :ATTR_NUM + 1].set(p["br"][0])
    ws = ws.at[ROW_WE, :ATTR_NUM + 1].set(wr_even[0])
    ws = ws.at[ROW_WO, :ATTR_NUM + 1].set(wr_odd[0])
    ws = ws.at[ROW_B1, :NUM_CLASS].set(p["b1"][0])
    ws = ws.at[ROW_WIN:ROW_WIN + 6, :HIDDEN].set(win)
    ws = ws.at[ROW_WOUT:ROW_WOUT + 6, :HIDDEN].set(wout)
    ws = ws.at[ROW_UZR:ROW_UZR + 4, :HIDDEN].set(uzr)
    ws = ws.at[ROW_U5:ROW_U5 + 2, :HIDDEN].set(p["u5"].T)
    ws = ws.at[ROW_WOH:ROW_WOH + 2, :HIDDEN].set(p["woh"].T)
    ws = ws.at[ROW_WOX:ROW_WOX + 2, :HIDDEN].set(p["wox"].T)
    ws = ws.at[ROW_BALL:ROW_BALL + 6, 0].set(ball[:, 0])
    ws = ws.at[ROW_BO:ROW_BO + 2, 0].set(p["bo"].T[:, 0])
    ws = ws.at[ROW_W2:ROW_W2 + 2, 0].set(p["w2"][:, 0])
    ws = ws.at[ROW_B2, 0].set(p["b2"][0, 0])

    return dict(wslab=ws, bigmat=bigmat)


# ---------------------------------------------------------------------------
# GPA.forward — fully jittable; card/scene are static flags, batch_size = 1.
# ---------------------------------------------------------------------------
@functools.partial(jax.jit, static_argnames=("card", "scene"))
def gpa_forward(kp, full_im, categories, card, scene):
    f32 = jnp.float32
    lane = jnp.arange(LANES)

    # ---- contextual (transposed: (HIDDEN, 128)), built on-device ----------
    if card:
        row0 = ((lane >= NUM_CLASS) & (lane < GRAPH_NUM)).astype(f32)
        # NOTE: indices >= ATTR_NUM would raise in torch; here they fall into
        # zero-padded lanes and are dropped.
        idxs = categories[0, 1:13].astype(jnp.int32)                 # 12 slots
        n = jnp.minimum(categories[0, 0].astype(jnp.int32), 12)
        valid = jnp.arange(12) < n
        hits = (idxs[:, None] + NUM_CLASS == lane[None, :]) & valid[:, None]
        row1 = hits.sum(axis=0).astype(f32)     # per-node occurrence count
    else:
        row0 = jnp.zeros((LANES,), f32)
        row1 = jnp.zeros((LANES,), f32)
    x0t = jnp.stack([row0, row1], axis=0)                            # (2,128)

    # channel-wise global average pool of the image (scene-stub input)
    pooled = jnp.mean(full_im.astype(f32), axis=(1, 2)).reshape(1, 3)

    vmem = pltpu.MemorySpace.VMEM
    scores = pl.pallas_call(
        functools.partial(_gpa_fused_kernel, time_step=TIME_STEP, scene=scene),
        in_specs=[pl.BlockSpec(memory_space=vmem)] * 4,
        out_specs=pl.BlockSpec(memory_space=vmem),
        out_shape=jax.ShapeDtypeStruct((NUM_CLASS, LANES), jnp.float32),
    )(pooled, x0t, kp["wslab"], kp["bigmat"])

    return scores[:, 0].reshape(1, NUM_CLASS)    # (batch=1, num_class)


if __name__ == "__main__":
    key = jax.random.PRNGKey(0)
    pkey, xkey = jax.random.split(key)
    params = init_params(pkey)
    kparams = prepare_kernel_params(params)

    # small deterministic example inputs
    full_im = jax.random.normal(xkey, (3, 16, 16), jnp.float32)           # CHW image
    categories = jnp.array([[5, 3, 7, 3, 15, 7, 0, 0, 0, 0, 0, 0, 0]], jnp.int32)

    out = gpa_forward(kparams, full_im, categories, card=True, scene=True)
    jax.block_until_ready(out)
    assert out.shape == (1, NUM_CLASS)
    print("KERNEL_OK")
</pallas_src>

<mosaic_0001>
module attributes {stable_mosaic.version = 11 : i64} {
  func.func @_gpa_fused_kernel(%arg0: memref<1x3xf32, #tpu.memory_space<vmem>>, %arg1: memref<2x128xf32, #tpu.memory_space<vmem>>, %arg2: memref<48x128xf32, #tpu.memory_space<vmem>>, %arg3: memref<128x640xf32, #tpu.memory_space<vmem>>, %arg4: memref<2x128xf32, #tpu.memory_space<vmem>>) attributes {dimension_semantics = [], scalar_prefetch = 0 : i64, scratch_operands = 0 : i64, tpu.core_type = #tpu.core_type<tc>} {
    %c0 = arith.constant 0 : index
    %c0_0 = arith.constant 0 : index
    %0 = vector.load %arg2[%c0, %c0_0] : memref<48x128xf32, #tpu.memory_space<vmem>>, vector<48x128xf32>
    %c0_1 = arith.constant 0 : index
    %c0_2 = arith.constant 0 : index
    %1 = vector.load %arg1[%c0_1, %c0_2] : memref<2x128xf32, #tpu.memory_space<vmem>>, vector<2x128xf32>
    %c0_3 = arith.constant 0 : index
    %c0_4 = arith.constant 0 : index
    %2 = vector.load %arg0[%c0_3, %c0_4] : memref<1x3xf32, #tpu.memory_space<vmem>>, vector<1x3xf32>
    %3 = vector.extract_strided_slice %0 {offsets = [0, 0], sizes = [3, 128], strides = [1, 1]} : vector<48x128xf32> to vector<3x128xf32>
    %cst = arith.constant dense<0.000000e+00> : vector<1x128xf32>
    %4 = tpu.matmul %2, %3, %cst {dimension_numbers = #tpu.dot_dimension_numbers<[1], [0], [0], [1], [0, 0, 1, 1], [], []>} : vector<1x3xf32>, vector<3x128xf32>, vector<1x128xf32> -> vector<1x128xf32>
    %5 = vector.extract_strided_slice %0 {offsets = [3, 0], sizes = [1, 128], strides = [1, 1]} : vector<48x128xf32> to vector<1x128xf32>
    %6 = arith.addf %4, %5 : vector<1x128xf32>
    %7 = vector.extract_strided_slice %1 {offsets = [0, 0], sizes = [1, 128], strides = [1, 1]} : vector<2x128xf32> to vector<1x128xf32>
    %8 = vector.extract_strided_slice %1 {offsets = [1, 0], sizes = [1, 128], strides = [1, 1]} : vector<2x128xf32> to vector<1x128xf32>
    %9 = arith.addf %8, %6 : vector<1x128xf32>
    %10 = tpu.concatenate %7, %9 in 0 : vector<1x128xf32>, vector<1x128xf32> -> vector<2x128xf32>
    %11 = vector.extract_strided_slice %0 {offsets = [8, 0], sizes = [6, 1], strides = [1, 1]} : vector<48x128xf32> to vector<6x1xf32>
    %12 = vector.extract_strided_slice %0 {offsets = [8, 1], sizes = [6, 1], strides = [1, 1]} : vector<48x128xf32> to vector<6x1xf32>
    %13 = vector.extract_strided_slice %0 {offsets = [14, 0], sizes = [6, 1], strides = [1, 1]} : vector<48x128xf32> to vector<6x1xf32>
    %14 = vector.extract_strided_slice %0 {offsets = [14, 1], sizes = [6, 1], strides = [1, 1]} : vector<48x128xf32> to vector<6x1xf32>
    %15 = vector.extract_strided_slice %0 {offsets = [20, 0], sizes = [4, 1], strides = [1, 1]} : vector<48x128xf32> to vector<4x1xf32>
    %16 = vector.extract_strided_slice %0 {offsets = [20, 1], sizes = [4, 1], strides = [1, 1]} : vector<48x128xf32> to vector<4x1xf32>
    %17 = vector.extract_strided_slice %0 {offsets = [24, 0], sizes = [2, 1], strides = [1, 1]} : vector<48x128xf32> to vector<2x1xf32>
    %18 = vector.extract_strided_slice %0 {offsets = [24, 1], sizes = [2, 1], strides = [1, 1]} : vector<48x128xf32> to vector<2x1xf32>
    %19 = vector.extract_strided_slice %0 {offsets = [30, 0], sizes = [6, 1], strides = [1, 1]} : vector<48x128xf32> to vector<6x1xf32>
    %c0_5 = arith.constant 0 : index
    %c0_6 = arith.constant 0 : index
    %20 = vector.load %arg3[%c0_5, %c0_6] : memref<128x640xf32, #tpu.memory_space<vmem>>, vector<128x256xf32>
    %cst_7 = arith.constant dense<0.000000e+00> : vector<2x256xf32>
    %21 = tpu.matmul %10, %20, %cst_7 {dimension_numbers = #tpu.dot_dimension_numbers<[1], [0], [0], [1], [0, 0, 1, 1], [], []>} : vector<2x128xf32>, vector<128x256xf32>, vector<2x256xf32> -> vector<2x256xf32>
    %22 = vector.extract_strided_slice %21 {offsets = [0, 0], sizes = [1, 128], strides = [1, 1]} : vector<2x256xf32> to vector<1x128xf32>
    %23 = vector.extract_strided_slice %21 {offsets = [1, 0], sizes = [1, 128], strides = [1, 1]} : vector<2x256xf32> to vector<1x128xf32>
    %24 = vector.extract_strided_slice %21 {offsets = [0, 128], sizes = [1, 128], strides = [1, 1]} : vector<2x256xf32> to vector<1x128xf32>
    %25 = vector.extract_strided_slice %21 {offsets = [1, 128], sizes = [1, 128], strides = [1, 1]} : vector<2x256xf32> to vector<1x128xf32>
    %26 = vector.broadcast %11 : vector<6x1xf32> to vector<6x128xf32>
    %27 = vector.broadcast %22 : vector<1x128xf32> to vector<6x128xf32>
    %28 = arith.mulf %26, %27 : vector<6x128xf32>
    %29 = vector.broadcast %12 : vector<6x1xf32> to vector<6x128xf32>
    %30 = vector.broadcast %23 : vector<1x128xf32> to vector<6x128xf32>
    %31 = arith.mulf %29, %30 : vector<6x128xf32>
    %32 = arith.addf %28, %31 : vector<6x128xf32>
    %33 = vector.broadcast %13 : vector<6x1xf32> to vector<6x128xf32>
    %34 = vector.broadcast %24 : vector<1x128xf32> to vector<6x128xf32>
    %35 = arith.mulf %33, %34 : vector<6x128xf32>
    %36 = arith.addf %32, %35 : vector<6x128xf32>
    %37 = vector.broadcast %14 : vector<6x1xf32> to vector<6x128xf32>
    %38 = vector.broadcast %25 : vector<1x128xf32> to vector<6x128xf32>
    %39 = arith.mulf %37, %38 : vector<6x128xf32>
    %40 = arith.addf %36, %39 : vector<6x128xf32>
    %41 = vector.broadcast %19 : vector<6x1xf32> to vector<6x128xf32>
    %42 = arith.addf %40, %41 : vector<6x128xf32>
    %43 = vector.extract_strided_slice %10 {offsets = [0, 0], sizes = [1, 128], strides = [1, 1]} : vector<2x128xf32> to vector<1x128xf32>
    %44 = vector.broadcast %15 : vector<4x1xf32> to vector<4x128xf32>
    %45 = vector.broadcast %43 : vector<1x128xf32> to vector<4x128xf32>
    %46 = arith.mulf %44, %45 : vector<4x128xf32>
    %47 = vector.extract_strided_slice %10 {offsets = [1, 0], sizes = [1, 128], strides = [1, 1]} : vector<2x128xf32> to vector<1x128xf32>
    %48 = vector.broadcast %16 : vector<4x1xf32> to vector<4x128xf32>
    %49 = vector.broadcast %47 : vector<1x128xf32> to vector<4x128xf32>
    %50 = arith.mulf %48, %49 : vector<4x128xf32>
    %51 = arith.addf %46, %50 : vector<4x128xf32>
    %52 = vector.extract_strided_slice %42 {offsets = [0, 0], sizes = [2, 128], strides = [1, 1]} : vector<6x128xf32> to vector<2x128xf32>
    %53 = vector.extract_strided_slice %51 {offsets = [0, 0], sizes = [2, 128], strides = [1, 1]} : vector<4x128xf32> to vector<2x128xf32>
    %54 = arith.addf %52, %53 : vector<2x128xf32>
    %55 = arith.negf %54 : vector<2x128xf32>
    %56 = math.exp %55 : vector<2x128xf32>
    %cst_8 = arith.constant 1.000000e+00 : f32
    %57 = vector.broadcast %cst_8 : f32 to vector<2x128xf32>
    %58 = arith.addf %57, %56 : vector<2x128xf32>
    %59 = arith.divf %57, %58 : vector<2x128xf32>
    %60 = vector.extract_strided_slice %42 {offsets = [2, 0], sizes = [2, 128], strides = [1, 1]} : vector<6x128xf32> to vector<2x128xf32>
    %61 = vector.extract_strided_slice %51 {offsets = [2, 0], sizes = [2, 128], strides = [1, 1]} : vector<4x128xf32> to vector<2x128xf32>
    %62 = arith.addf %60, %61 : vector<2x128xf32>
    %63 = arith.negf %62 : vector<2x128xf32>
    %64 = math.exp %63 : vector<2x128xf32>
    %cst_9 = arith.constant 1.000000e+00 : f32
    %65 = vector.broadcast %cst_9 : f32 to vector<2x128xf32>
    %66 = arith.addf %65, %64 : vector<2x128xf32>
    %67 = arith.divf %65, %66 : vector<2x128xf32>
    %68 = arith.mulf %67, %10 : vector<2x128xf32>
    %69 = vector.extract_strided_slice %42 {offsets = [4, 0], sizes = [2, 128], strides = [1, 1]} : vector<6x128xf32> to vector<2x128xf32>
    %70 = vector.extract_strided_slice %68 {offsets = [0, 0], sizes = [1, 128], strides = [1, 1]} : vector<2x128xf32> to vector<1x128xf32>
    %71 = vector.broadcast %17 : vector<2x1xf32> to vector<2x128xf32>
    %72 = vector.broadcast %70 : vector<1x128xf32> to vector<2x128xf32>
    %73 = arith.mulf %71, %72 : vector<2x128xf32>
    %74 = arith.addf %69, %73 : vector<2x128xf32>
    %75 = vector.extract_strided_slice %68 {offsets = [1, 0], sizes = [1, 128], strides = [1, 1]} : vector<2x128xf32> to vector<1x128xf32>
    %76 = vector.broadcast %18 : vector<2x1xf32> to vector<2x128xf32>
    %77 = vector.broadcast %75 : vector<1x128xf32> to vector<2x128xf32>
    %78 = arith.mulf %76, %77 : vector<2x128xf32>
    %79 = arith.addf %74, %78 : vector<2x128xf32>
    %80 = math.tanh %79 : vector<2x128xf32>
    %cst_10 = arith.constant 1.000000e+00 : f32
    %81 = vector.broadcast %cst_10 : f32 to vector<2x128xf32>
    %82 = arith.subf %81, %59 : vector<2x128xf32>
    %83 = arith.mulf %82, %10 : vector<2x128xf32>
    %84 = arith.mulf %59, %80 : vector<2x128xf32>
    %85 = arith.addf %83, %84 : vector<2x128xf32>
    %c0_11 = arith.constant 0 : index
    %c0_12 = arith.constant 0 : index
    %86 = vector.load %arg3[%c0_11, %c0_12] : memref<128x640xf32, #tpu.memory_space<vmem>>, vector<128x256xf32>
    %cst_13 = arith.constant dense<0.000000e+00> : vector<2x256xf32>
    %87 = tpu.matmul %85, %86, %cst_13 {dimension_numbers = #tpu.dot_dimension_numbers<[1], [0], [0], [1], [0, 0, 1, 1], [], []>} : vector<2x128xf32>, vector<128x256xf32>, vector<2x256xf32> -> vector<2x256xf32>
    %88 = vector.extract_strided_slice %87 {offsets = [0, 0], sizes = [1, 128], strides = [1, 1]} : vector<2x256xf32> to vector<1x128xf32>
    %89 = vector.extract_strided_slice %87 {offsets = [1, 0], sizes = [1, 128], strides = [1, 1]} : vector<2x256xf32> to vector<1x128xf32>
    %90 = vector.extract_strided_slice %87 {offsets = [0, 128], sizes = [1, 128], strides = [1, 1]} : vector<2x256xf32> to vector<1x128xf32>
    %91 = vector.extract_strided_slice %87 {offsets = [1, 128], sizes = [1, 128], strides = [1, 1]} : vector<2x256xf32> to vector<1x128xf32>
    %92 = vector.broadcast %11 : vector<6x1xf32> to vector<6x128xf32>
    %93 = vector.broadcast %88 : vector<1x128xf32> to vector<6x128xf32>
    %94 = arith.mulf %92, %93 : vector<6x128xf32>
    %95 = vector.broadcast %12 : vector<6x1xf32> to vector<6x128xf32>
    %96 = vector.broadcast %89 : vector<1x128xf32> to vector<6x128xf32>
    %97 = arith.mulf %95, %96 : vector<6x128xf32>
    %98 = arith.addf %94, %97 : vector<6x128xf32>
    %99 = vector.broadcast %13 : vector<6x1xf32> to vector<6x128xf32>
    %100 = vector.broadcast %90 : vector<1x128xf32> to vector<6x128xf32>
    %101 = arith.mulf %99, %100 : vector<6x128xf32>
    %102 = arith.addf %98, %101 : vector<6x128xf32>
    %103 = vector.broadcast %14 : vector<6x1xf32> to vector<6x128xf32>
    %104 = vector.broadcast %91 : vector<1x128xf32> to vector<6x128xf32>
    %105 = arith.mulf %103, %104 : vector<6x128xf32>
    %106 = arith.addf %102, %105 : vector<6x128xf32>
    %107 = vector.broadcast %19 : vector<6x1xf32> to vector<6x128xf32>
    %108 = arith.addf %106, %107 : vector<6x128xf32>
    %109 = vector.extract_strided_slice %85 {offsets = [0, 0], sizes = [1, 128], strides = [1, 1]} : vector<2x128xf32> to vector<1x128xf32>
    %110 = vector.broadcast %15 : vector<4x1xf32> to vector<4x128xf32>
    %111 = vector.broadcast %109 : vector<1x128xf32> to vector<4x128xf32>
    %112 = arith.mulf %110, %111 : vector<4x128xf32>
    %113 = vector.extract_strided_slice %85 {offsets = [1, 0], sizes = [1, 128], strides = [1, 1]} : vector<2x128xf32> to vector<1x128xf32>
    %114 = vector.broadcast %16 : vector<4x1xf32> to vector<4x128xf32>
    %115 = vector.broadcast %113 : vector<1x128xf32> to vector<4x128xf32>
    %116 = arith.mulf %114, %115 : vector<4x128xf32>
    %117 = arith.addf %112, %116 : vector<4x128xf32>
    %118 = vector.extract_strided_slice %108 {offsets = [0, 0], sizes = [2, 128], strides = [1, 1]} : vector<6x128xf32> to vector<2x128xf32>
    %119 = vector.extract_strided_slice %117 {offsets = [0, 0], sizes = [2, 128], strides = [1, 1]} : vector<4x128xf32> to vector<2x128xf32>
    %120 = arith.addf %118, %119 : vector<2x128xf32>
    %121 = arith.negf %120 : vector<2x128xf32>
    %122 = math.exp %121 : vector<2x128xf32>
    %cst_14 = arith.constant 1.000000e+00 : f32
    %123 = vector.broadcast %cst_14 : f32 to vector<2x128xf32>
    %124 = arith.addf %123, %122 : vector<2x128xf32>
    %125 = arith.divf %123, %124 : vector<2x128xf32>
    %126 = vector.extract_strided_slice %108 {offsets = [2, 0], sizes = [2, 128], strides = [1, 1]} : vector<6x128xf32> to vector<2x128xf32>
    %127 = vector.extract_strided_slice %117 {offsets = [2, 0], sizes = [2, 128], strides = [1, 1]} : vector<4x128xf32> to vector<2x128xf32>
    %128 = arith.addf %126, %127 : vector<2x128xf32>
    %129 = arith.negf %128 : vector<2x128xf32>
    %130 = math.exp %129 : vector<2x128xf32>
    %cst_15 = arith.constant 1.000000e+00 : f32
    %131 = vector.broadcast %cst_15 : f32 to vector<2x128xf32>
    %132 = arith.addf %131, %130 : vector<2x128xf32>
    %133 = arith.divf %131, %132 : vector<2x128xf32>
    %134 = arith.mulf %133, %85 : vector<2x128xf32>
    %135 = vector.extract_strided_slice %108 {offsets = [4, 0], sizes = [2, 128], strides = [1, 1]} : vector<6x128xf32> to vector<2x128xf32>
    %136 = vector.extract_strided_slice %134 {offsets = [0, 0], sizes = [1, 128], strides = [1, 1]} : vector<2x128xf32> to vector<1x128xf32>
    %137 = vector.broadcast %17 : vector<2x1xf32> to vector<2x128xf32>
    %138 = vector.broadcast %136 : vector<1x128xf32> to vector<2x128xf32>
    %139 = arith.mulf %137, %138 : vector<2x128xf32>
    %140 = arith.addf %135, %139 : vector<2x128xf32>
    %141 = vector.extract_strided_slice %134 {offsets = [1, 0], sizes = [1, 128], strides = [1, 1]} : vector<2x128xf32> to vector<1x128xf32>
    %142 = vector.broadcast %18 : vector<2x1xf32> to vector<2x128xf32>
    %143 = vector.broadcast %141 : vector<1x128xf32> to vector<2x128xf32>
    %144 = arith.mulf %142, %143 : vector<2x128xf32>
    %145 = arith.addf %140, %144 : vector<2x128xf32>
    %146 = math.tanh %145 : vector<2x128xf32>
    %cst_16 = arith.constant 1.000000e+00 : f32
    %147 = vector.broadcast %cst_16 : f32 to vector<2x128xf32>
    %148 = arith.subf %147, %125 : vector<2x128xf32>
    %149 = arith.mulf %148, %85 : vector<2x128xf32>
    %150 = arith.mulf %125, %146 : vector<2x128xf32>
    %151 = arith.addf %149, %150 : vector<2x128xf32>
    %c0_17 = arith.constant 0 : index
    %c0_18 = arith.constant 0 : index
    %152 = vector.load %arg3[%c0_17, %c0_18] : memref<128x640xf32, #tpu.memory_space<vmem>>, vector<128x256xf32>
    %cst_19 = arith.constant dense<0.000000e+00> : vector<2x256xf32>
    %153 = tpu.matmul %151, %152, %cst_19 {dimension_numbers = #tpu.dot_dimension_numbers<[1], [0], [0], [1], [0, 0, 1, 1], [], []>} : vector<2x128xf32>, vector<128x256xf32>, vector<2x256xf32> -> vector<2x256xf32>
    %154 = vector.extract_strided_slice %153 {offsets = [0, 0], sizes = [1, 128], strides = [1, 1]} : vector<2x256xf32> to vector<1x128xf32>
    %155 = vector.extract_strided_slice %153 {offsets = [1, 0], sizes = [1, 128], strides = [1, 1]} : vector<2x256xf32> to vector<1x128xf32>
    %156 = vector.extract_strided_slice %153 {offsets = [0, 128], sizes = [1, 128], strides = [1, 1]} : vector<2x256xf32> to vector<1x128xf32>
    %157 = vector.extract_strided_slice %153 {offsets = [1, 128], sizes = [1, 128], strides = [1, 1]} : vector<2x256xf32> to vector<1x128xf32>
    %158 = vector.broadcast %11 : vector<6x1xf32> to vector<6x128xf32>
    %159 = vector.broadcast %154 : vector<1x128xf32> to vector<6x128xf32>
    %160 = arith.mulf %158, %159 : vector<6x128xf32>
    %161 = vector.broadcast %12 : vector<6x1xf32> to vector<6x128xf32>
    %162 = vector.broadcast %155 : vector<1x128xf32> to vector<6x128xf32>
    %163 = arith.mulf %161, %162 : vector<6x128xf32>
    %164 = arith.addf %160, %163 : vector<6x128xf32>
    %165 = vector.broadcast %13 : vector<6x1xf32> to vector<6x128xf32>
    %166 = vector.broadcast %156 : vector<1x128xf32> to vector<6x128xf32>
    %167 = arith.mulf %165, %166 : vector<6x128xf32>
    %168 = arith.addf %164, %167 : vector<6x128xf32>
    %169 = vector.broadcast %14 : vector<6x1xf32> to vector<6x128xf32>
    %170 = vector.broadcast %157 : vector<1x128xf32> to vector<6x128xf32>
    %171 = arith.mulf %169, %170 : vector<6x128xf32>
    %172 = arith.addf %168, %171 : vector<6x128xf32>
    %173 = vector.broadcast %19 : vector<6x1xf32> to vector<6x128xf32>
    %174 = arith.addf %172, %173 : vector<6x128xf32>
    %175 = vector.extract_strided_slice %151 {offsets = [0, 0], sizes = [1, 128], strides = [1, 1]} : vector<2x128xf32> to vector<1x128xf32>
    %176 = vector.broadcast %15 : vector<4x1xf32> to vector<4x128xf32>
    %177 = vector.broadcast %175 : vector<1x128xf32> to vector<4x128xf32>
    %178 = arith.mulf %176, %177 : vector<4x128xf32>
    %179 = vector.extract_strided_slice %151 {offsets = [1, 0], sizes = [1, 128], strides = [1, 1]} : vector<2x128xf32> to vector<1x128xf32>
    %180 = vector.broadcast %16 : vector<4x1xf32> to vector<4x128xf32>
    %181 = vector.broadcast %179 : vector<1x128xf32> to vector<4x128xf32>
    %182 = arith.mulf %180, %181 : vector<4x128xf32>
    %183 = arith.addf %178, %182 : vector<4x128xf32>
    %184 = vector.extract_strided_slice %174 {offsets = [0, 0], sizes = [2, 128], strides = [1, 1]} : vector<6x128xf32> to vector<2x128xf32>
    %185 = vector.extract_strided_slice %183 {offsets = [0, 0], sizes = [2, 128], strides = [1, 1]} : vector<4x128xf32> to vector<2x128xf32>
    %186 = arith.addf %184, %185 : vector<2x128xf32>
    %187 = arith.negf %186 : vector<2x128xf32>
    %188 = math.exp %187 : vector<2x128xf32>
    %cst_20 = arith.constant 1.000000e+00 : f32
    %189 = vector.broadcast %cst_20 : f32 to vector<2x128xf32>
    %190 = arith.addf %189, %188 : vector<2x128xf32>
    %191 = arith.divf %189, %190 : vector<2x128xf32>
    %192 = vector.extract_strided_slice %174 {offsets = [2, 0], sizes = [2, 128], strides = [1, 1]} : vector<6x128xf32> to vector<2x128xf32>
    %193 = vector.extract_strided_slice %183 {offsets = [2, 0], sizes = [2, 128], strides = [1, 1]} : vector<4x128xf32> to vector<2x128xf32>
    %194 = arith.addf %192, %193 : vector<2x128xf32>
    %195 = arith.negf %194 : vector<2x128xf32>
    %196 = math.exp %195 : vector<2x128xf32>
    %cst_21 = arith.constant 1.000000e+00 : f32
    %197 = vector.broadcast %cst_21 : f32 to vector<2x128xf32>
    %198 = arith.addf %197, %196 : vector<2x128xf32>
    %199 = arith.divf %197, %198 : vector<2x128xf32>
    %200 = arith.mulf %199, %151 : vector<2x128xf32>
    %201 = vector.extract_strided_slice %174 {offsets = [4, 0], sizes = [2, 128], strides = [1, 1]} : vector<6x128xf32> to vector<2x128xf32>
    %202 = vector.extract_strided_slice %200 {offsets = [0, 0], sizes = [1, 128], strides = [1, 1]} : vector<2x128xf32> to vector<1x128xf32>
    %203 = vector.broadcast %17 : vector<2x1xf32> to vector<2x128xf32>
    %204 = vector.broadcast %202 : vector<1x128xf32> to vector<2x128xf32>
    %205 = arith.mulf %203, %204 : vector<2x128xf32>
    %206 = arith.addf %201, %205 : vector<2x128xf32>
    %207 = vector.extract_strided_slice %200 {offsets = [1, 0], sizes = [1, 128], strides = [1, 1]} : vector<2x128xf32> to vector<1x128xf32>
    %208 = vector.broadcast %18 : vector<2x1xf32> to vector<2x128xf32>
    %209 = vector.broadcast %207 : vector<1x128xf32> to vector<2x128xf32>
    %210 = arith.mulf %208, %209 : vector<2x128xf32>
    %211 = arith.addf %206, %210 : vector<2x128xf32>
    %212 = math.tanh %211 : vector<2x128xf32>
    %cst_22 = arith.constant 1.000000e+00 : f32
    %213 = vector.broadcast %cst_22 : f32 to vector<2x128xf32>
    %214 = arith.subf %213, %191 : vector<2x128xf32>
    %215 = arith.mulf %214, %151 : vector<2x128xf32>
    %216 = arith.mulf %191, %212 : vector<2x128xf32>
    %217 = arith.addf %215, %216 : vector<2x128xf32>
    %218 = vector.extract_strided_slice %0 {offsets = [26, 0], sizes = [2, 1], strides = [1, 1]} : vector<48x128xf32> to vector<2x1xf32>
    %219 = vector.extract_strided_slice %0 {offsets = [26, 1], sizes = [2, 1], strides = [1, 1]} : vector<48x128xf32> to vector<2x1xf32>
    %220 = vector.extract_strided_slice %0 {offsets = [28, 0], sizes = [2, 1], strides = [1, 1]} : vector<48x128xf32> to vector<2x1xf32>
    %221 = vector.extract_strided_slice %0 {offsets = [28, 1], sizes = [2, 1], strides = [1, 1]} : vector<48x128xf32> to vector<2x1xf32>
    %222 = vector.extract_strided_slice %0 {offsets = [36, 0], sizes = [2, 1], strides = [1, 1]} : vector<48x128xf32> to vector<2x1xf32>
    %223 = vector.extract_strided_slice %217 {offsets = [0, 0], sizes = [1, 128], strides = [1, 1]} : vector<2x128xf32> to vector<1x128xf32>
    %224 = vector.broadcast %218 : vector<2x1xf32> to vector<2x128xf32>
    %225 = vector.broadcast %223 : vector<1x128xf32> to vector<2x128xf32>
    %226 = arith.mulf %224, %225 : vector<2x128xf32>
    %227 = vector.extract_strided_slice %217 {offsets = [1, 0], sizes = [1, 128], strides = [1, 1]} : vector<2x128xf32> to vector<1x128xf32>
    %228 = vector.broadcast %219 : vector<2x1xf32> to vector<2x128xf32>
    %229 = vector.broadcast %227 : vector<1x128xf32> to vector<2x128xf32>
    %230 = arith.mulf %228, %229 : vector<2x128xf32>
    %231 = arith.addf %226, %230 : vector<2x128xf32>
    %232 = vector.extract_strided_slice %10 {offsets = [0, 0], sizes = [1, 128], strides = [1, 1]} : vector<2x128xf32> to vector<1x128xf32>
    %233 = vector.broadcast %220 : vector<2x1xf32> to vector<2x128xf32>
    %234 = vector.broadcast %232 : vector<1x128xf32> to vector<2x128xf32>
    %235 = arith.mulf %233, %234 : vector<2x128xf32>
    %236 = arith.addf %231, %235 : vector<2x128xf32>
    %237 = vector.extract_strided_slice %10 {offsets = [1, 0], sizes = [1, 128], strides = [1, 1]} : vector<2x128xf32> to vector<1x128xf32>
    %238 = vector.broadcast %221 : vector<2x1xf32> to vector<2x128xf32>
    %239 = vector.broadcast %237 : vector<1x128xf32> to vector<2x128xf32>
    %240 = arith.mulf %238, %239 : vector<2x128xf32>
    %241 = arith.addf %236, %240 : vector<2x128xf32>
    %242 = vector.broadcast %222 : vector<2x1xf32> to vector<2x128xf32>
    %243 = arith.addf %241, %242 : vector<2x128xf32>
    %244 = math.tanh %243 : vector<2x128xf32>
    %c0_23 = arith.constant 0 : index
    %c256 = arith.constant 256 : index
    %245 = vector.load %arg3[%c0_23, %c256] : memref<128x640xf32, #tpu.memory_space<vmem>>, vector<128x256xf32>
    %cst_24 = arith.constant dense<0.000000e+00> : vector<2x256xf32>
    %246 = tpu.matmul %244, %245, %cst_24 {dimension_numbers = #tpu.dot_dimension_numbers<[1], [0], [0], [1], [0, 0, 1, 1], [], []>} : vector<2x128xf32>, vector<128x256xf32>, vector<2x256xf32> -> vector<2x256xf32>
    %247 = vector.extract_strided_slice %246 {offsets = [0, 0], sizes = [1, 128], strides = [1, 1]} : vector<2x256xf32> to vector<1x128xf32>
    %248 = vector.extract_strided_slice %246 {offsets = [1, 128], sizes = [1, 128], strides = [1, 1]} : vector<2x256xf32> to vector<1x128xf32>
    %249 = arith.addf %247, %248 : vector<1x128xf32>
    %250 = vector.extract_strided_slice %0 {offsets = [4, 0], sizes = [1, 128], strides = [1, 1]} : vector<48x128xf32> to vector<1x128xf32>
    %251 = arith.addf %249, %250 : vector<1x128xf32>
    %252 = vector.extract_strided_slice %0 {offsets = [5, 0], sizes = [1, 128], strides = [1, 1]} : vector<48x128xf32> to vector<1x128xf32>
    %253 = vector.extract_strided_slice %0 {offsets = [6, 0], sizes = [1, 128], strides = [1, 1]} : vector<48x128xf32> to vector<1x128xf32>
    %254 = vector.extract_strided_slice %244 {offsets = [0, 0], sizes = [1, 1], strides = [1, 1]} : vector<2x128xf32> to vector<1x1xf32>
    %255 = vector.broadcast %254 : vector<1x1xf32> to vector<1x128xf32>
    %256 = arith.mulf %255, %252 : vector<1x128xf32>
    %257 = arith.addf %251, %256 : vector<1x128xf32>
    %258 = vector.extract_strided_slice %244 {offsets = [1, 0], sizes = [1, 1], strides = [1, 1]} : vector<2x128xf32> to vector<1x1xf32>
    %259 = vector.broadcast %258 : vector<1x1xf32> to vector<1x128xf32>
    %260 = arith.mulf %259, %253 : vector<1x128xf32>
    %261 = arith.addf %257, %260 : vector<1x128xf32>
    %262 = vector.extract_strided_slice %244 {offsets = [0, 1], sizes = [1, 1], strides = [1, 1]} : vector<2x128xf32> to vector<1x1xf32>
    %263 = vector.broadcast %262 : vector<1x1xf32> to vector<1x128xf32>
    %264 = arith.mulf %263, %252 : vector<1x128xf32>
    %265 = arith.addf %251, %264 : vector<1x128xf32>
    %266 = vector.extract_strided_slice %244 {offsets = [1, 1], sizes = [1, 1], strides = [1, 1]} : vector<2x128xf32> to vector<1x1xf32>
    %267 = vector.broadcast %266 : vector<1x1xf32> to vector<1x128xf32>
    %268 = arith.mulf %267, %253 : vector<1x128xf32>
    %269 = arith.addf %265, %268 : vector<1x128xf32>
    %270 = tpu.concatenate %261, %269 in 0 : vector<1x128xf32>, vector<1x128xf32> -> vector<2x128xf32>
    %c0_25 = arith.constant 0 : index
    %c512 = arith.constant 512 : index
    %271 = vector.load %arg3[%c0_25, %c512] : memref<128x640xf32, #tpu.memory_space<vmem>>, vector<128x128xf32>
    %cst_26 = arith.constant dense<0.000000e+00> : vector<2x128xf32>
    %272 = tpu.matmul %270, %271, %cst_26 {dimension_numbers = #tpu.dot_dimension_numbers<[1], [0], [0], [1], [0, 0, 1, 1], [], []>} : vector<2x128xf32>, vector<128x128xf32>, vector<2x128xf32> -> vector<2x128xf32>
    %273 = vector.extract_strided_slice %0 {offsets = [7, 0], sizes = [1, 128], strides = [1, 1]} : vector<48x128xf32> to vector<1x128xf32>
    %274 = vector.broadcast %273 : vector<1x128xf32> to vector<2x128xf32>
    %275 = arith.addf %272, %274 : vector<2x128xf32>
    %cst_27 = arith.constant 0.000000e+00 : f32
    %276 = vector.broadcast %cst_27 : f32 to vector<2x128xf32>
    %277 = arith.maximumf %275, %276 : vector<2x128xf32>
    %278 = vector.extract_strided_slice %277 {offsets = [0, 0], sizes = [2, 1], strides = [1, 1]} : vector<2x128xf32> to vector<2x1xf32>
    %279 = vector.extract_strided_slice %0 {offsets = [38, 0], sizes = [1, 1], strides = [1, 1]} : vector<48x128xf32> to vector<1x1xf32>
    %280 = vector.broadcast %279 : vector<1x1xf32> to vector<2x1xf32>
    %281 = arith.mulf %278, %280 : vector<2x1xf32>
    %282 = vector.extract_strided_slice %277 {offsets = [0, 1], sizes = [2, 1], strides = [1, 1]} : vector<2x128xf32> to vector<2x1xf32>
    %283 = vector.extract_strided_slice %0 {offsets = [39, 0], sizes = [1, 1], strides = [1, 1]} : vector<48x128xf32> to vector<1x1xf32>
    %284 = vector.broadcast %283 : vector<1x1xf32> to vector<2x1xf32>
    %285 = arith.mulf %282, %284 : vector<2x1xf32>
    %286 = arith.addf %281, %285 : vector<2x1xf32>
    %287 = vector.extract_strided_slice %0 {offsets = [40, 0], sizes = [1, 1], strides = [1, 1]} : vector<48x128xf32> to vector<1x1xf32>
    %288 = vector.broadcast %287 : vector<1x1xf32> to vector<2x1xf32>
    %289 = arith.addf %286, %288 : vector<2x1xf32>
    %290 = vector.shape_cast %289 : vector<2x1xf32> to vector<2x1xf32>
    %291 = vector.broadcast %290 : vector<2x1xf32> to vector<2x128xf32>
    %c0_28 = arith.constant 0 : index
    %c0_29 = arith.constant 0 : index
    %292 = vector.load %arg4[%c0_28, %c0_29] : memref<2x128xf32, #tpu.memory_space<vmem>>, vector<2x128xf32>
    tpu.vector_store %arg4[%c0_28, %c0_29], %291 {strides = array<i32>} : memref<2x128xf32, #tpu.memory_space<vmem>>, vector<2x128xf32>,
    return
  }
}

</mosaic_0001>

<llo_original>
// kernel: gpa_forward.1
$region0: #{gpa_forward.1}
  #allocation0 [shape = 'u32[]', space=smem, size = 0x4, offset = 0x4, fixed_abs, tag = 'smem constant byte address 0x4 - core index']
  #allocation1 [shape = 'u32[144,128]{1,0:T(1,128)}', space=vmem, size = 0x12000, scoped, tag = 'internal scratch']
  %s0 = inlined_call_operand.vmem [shape: f32[1,3], index: 0, kind: input, shape index: {}]
  %s1 = inlined_call_operand.vmem [shape: f32[2,128], index: 1, kind: input, shape index: {}]
  %s2 = inlined_call_operand.vmem [shape: f32[48,128], index: 2, kind: input, shape index: {}]
  %s3 = inlined_call_operand.hbm [shape: f32[128,640], index: 3, kind: input, shape index: {}]
  %s4 = inlined_call_operand.vmem [shape: f32[2,128], index: 4, kind: output, shape index: {}]
  %s5 = sld [smem:[#allocation0]]
  $region30: #{gpa_forward.1} parent=0
    _
  %s7 = ssub.s32 1, %s5
  %s8 = scalar_select 0, %s7, %s5
  $region1: #{gpa_forward.1} parent=0
    #allocation2 [shape = 'u8[327680]{0}', space=vmem, size = 0x50000, scoped, tag = 'input window, operand 3, single buffered']
    #allocation3 [shape = 's32[1]{0}', space=sflag, size = 0x4, scoped, tag = 'scoped memory for gpa_forward.1']
    %9 = vsyncpa [#allocation3], 0
    // Predicated region
    $region2: #{gpa_forward.1} parent=1 // pred_check
      _
    $region3: #{gpa_forward.1} parent=1 // pred_check_branch
      %11 = sbr.rel (0) target = $region5
    $region4: #{gpa_forward.1} parent=1 // pred_region
      _
    $region5: #{gpa_forward.1} parent=1 // pred_fallthru
      _
    // Predicated region
    $region6: #{gpa_forward.1} parent=1 // pred_check
      _
    $region7: #{gpa_forward.1} parent=1 // pred_check_branch
      %13 = sbr.rel (0) target = $region9
    $region8: #{gpa_forward.1} parent=1 // pred_region
      _
    $region9: #{gpa_forward.1} parent=1 // pred_fallthru
      _
    // Predicated region
    $region10: #{gpa_forward.1} parent=1 // pred_check
      _
    $region11: #{gpa_forward.1} parent=1 // pred_check_branch
      %15 = sbr.rel (0) target = $region13
    $region12: #{gpa_forward.1} parent=1 // pred_region
      _
    $region13: #{gpa_forward.1} parent=1 // pred_fallthru
      _
    // Predicated region
    $region14: #{gpa_forward.1} parent=1 // pred_check
      _
    $region15: #{gpa_forward.1} parent=1 // pred_check_branch
      %17 = sbr.rel (0) target = $region17
    $region16: #{gpa_forward.1} parent=1 // pred_region
      %s19 = ssub.s32 10240, 10240
      %20 = vsyncadd [#allocation3], %s19
      %s21 = sshll.u32 [#allocation2], 4
      %s22 = int_to_ptr.vmem [resolvable:$true] %s21
      %27 = dma.hbm_to_vmem [thread:$0]  %s3, 10240, %s22, [#allocation3], 640, 640, 40
    $region17: #{gpa_forward.1} parent=1 // pred_fallthru
      _
    // Predicated region
    $region18: #{gpa_forward.1} parent=1 // pred_check
      _
    $region19: #{gpa_forward.1} parent=1 // pred_check_branch
      %29 = sbr.rel (0) target = $region21
    $region20: #{gpa_forward.1} parent=1 // pred_region
      %30 = dma.done [#allocation3], 10240
    $region21: #{gpa_forward.1} parent=1 // pred_fallthru
      _
    %v31 = vld [vmem:[%s2] sm:$0xff]
    %v32 = vld [vmem:[%s2 + $0x8] sm:$0xff]
    %v33 = vld [vmem:[%s2 + $0x10] sm:$0xff]
    %v34 = vld [vmem:[%s2 + $0x18] sm:$0xff]
    %v35 = vld [vmem:[%s2 + $0x20] sm:$0xff]
    %v36 = vld [vmem:[%s2 + $0x28] sm:$0xff]
    %v37 = vld [vmem:[%s1] sm:$0x3]
    %v38 = vld [vmem:[%s0] sm:$0x1]
    %v40 = vrot.slane %v31, 3
    %vm42 = vcmask 23552
    %v44 = vsel %vm42, %v38, 0
    %vm46 = vcmask 1042432
    %v47 = vsel %vm46, %v31, 0
    %49 = vmatprep.subr.mxu0 0.0
    %50 = vmatpush1.msra.mxu0 0.0
    %51 = vmatprep.subr.mxu0 0.0
    %52 = vmatpush1.msra.mxu0 0.0
    %53 = vmatprep.subr.mxu0 0.0
    %54 = vmatpush1.msra.mxu0 0.0
    %55 = vmatprep.subr.mxu0 0.0
    %56 = vmatpush1.msra.mxu0 0.0
    %57 = vmatprep.subr.mxu0 0.0
    %58 = vmatpush1.msra.mxu0 0.0
    %59 = vmatprep.subr.mxu0 0.0
    %60 = vmatpush1.msra.mxu0 0.0
    %61 = vmatprep.subr.mxu0 0.0
    %62 = vmatpush1.msra.mxu0 0.0
    %63 = vmatprep.subr.mxu0 0.0
    %64 = vmatpush1.msra.mxu0 0.0
    %65 = vmatprep.subr.mxu0 0.0
    %66 = vmatpush1.msra.mxu0 0.0
    %67 = vmatprep.subr.mxu0 0.0
    %68 = vmatpush1.msra.mxu0 0.0
    %69 = vmatprep.subr.mxu0 0.0
    %70 = vmatpush1.msra.mxu0 0.0
    %71 = vmatprep.subr.mxu0 0.0
    %72 = vmatpush1.msra.mxu0 0.0
    %73 = vmatprep.subr.mxu0 0.0
    %74 = vmatpush1.msra.mxu0 0.0
    %75 = vmatprep.subr.mxu0 0.0
    %76 = vmatpush1.msra.mxu0 0.0
    %77 = vmatprep.subr.mxu0 0.0
    %78 = vmatpush1.msra.mxu0 0.0
    %79 = vmatprep.subr.mxu0 0.0
    %80 = vmatpush1.msra.mxu0 %v47
    %81 = vmatprep.subr.mxu0 0.0
    %82 = vmatpush2.msra.mxu0 0.0
    %83 = vmatprep.subr.mxu0 0.0
    %84 = vmatpush2.msra.mxu0 0.0
    %85 = vmatprep.subr.mxu0 0.0
    %86 = vmatpush2.msra.mxu0 0.0
    %87 = vmatprep.subr.mxu0 0.0
    %88 = vmatpush2.msra.mxu0 0.0
    %89 = vmatprep.subr.mxu0 0.0
    %90 = vmatpush2.msra.mxu0 0.0
    %91 = vmatprep.subr.mxu0 0.0
    %92 = vmatpush2.msra.mxu0 0.0
    %93 = vmatprep.subr.mxu0 0.0
    %94 = vmatpush2.msra.mxu0 0.0
    %95 = vmatprep.subr.mxu0 0.0
    %96 = vmatpush2.msra.mxu0 0.0
    %97 = vmatprep.subr.mxu0 0.0
    %98 = vmatpush2.msra.mxu0 0.0
    %99 = vmatprep.subr.mxu0 0.0
    %100 = vmatpush2.msra.mxu0 0.0
    %101 = vmatprep.subr.mxu0 0.0
    %102 = vmatpush2.msra.mxu0 0.0
    %103 = vmatprep.subr.mxu0 0.0
    %104 = vmatpush2.msra.mxu0 0.0
    %105 = vmatprep.subr.mxu0 0.0
    %106 = vmatpush2.msra.mxu0 0.0
    %107 = vmatprep.subr.mxu0 0.0
    %108 = vmatpush2.msra.mxu0 0.0
    %109 = vmatprep.subr.mxu0 0.0
    %110 = vmatpush2.msra.mxu0 0.0
    %111 = vmatprep.subr.mxu0 0.0
    %112 = vmatpush2.msra.mxu0 0.0
    %113 = vmatprep.mubr.f32.mxu0 0.0
    %114 = vmatmul.mubr.f32.gmra.mxu0 %v44
    %v115 = vpop.f32.mrf.mxu0
    %v116 = vadd.f32 %v40, %v115
    %v117 = vpop.f32.mrf.mxu0
    %118 = vdwg.mxu0
    %v120 = vrot.slane %v116, 7
    %v122 = vadd.f32 %v37, %v120
    %vm123 = vcmask 1040384
    %v124 = vsel %vm123, %v37, %v122
    %v125 = vld [vmem:[#allocation2] sm:$0xff]
    %v126 = vld [vmem:[#allocation2 + $0x8] sm:$0xff]
    %v127 = vld [vmem:[#allocation2 + $0x28] sm:$0xff]
    %v128 = vld [vmem:[#allocation2 + $0x30] sm:$0xff]
    %v129 = vld [vmem:[#allocation2 + $0x50] sm:$0xff]
    %v130 = vld [vmem:[#allocation2 + $0x58] sm:$0xff]
    %v131 = vld [vmem:[#allocation2 + $0x78] sm:$0xff]
    %v132 = vld [vmem:[#allocation2 + $0x80] sm:$0xff]
    %v133 = vld [vmem:[#allocation2 + $0xa0] sm:$0xff]
    %v134 = vld [vmem:[#allocation2 + $0xa8] sm:$0xff]
    %v135 = vld [vmem:[#allocation2 + $0xc8] sm:$0xff]
    %v136 = vld [vmem:[#allocation2 + $0xd0] sm:$0xff]
    %v137 = vld [vmem:[#allocation2 + $0xf0] sm:$0xff]
    %v138 = vld [vmem:[#allocation2 + $0xf8] sm:$0xff]
    %v139 = vld [vmem:[#allocation2 + $0x118] sm:$0xff]
    %v140 = vld [vmem:[#allocation2 + $0x120] sm:$0xff]
    %v141 = vld [vmem:[#allocation2 + $0x140] sm:$0xff]
    %v142 = vld [vmem:[#allocation2 + $0x148] sm:$0xff]
    %v143 = vld [vmem:[#allocation2 + $0x168] sm:$0xff]
    %v144 = vld [vmem:[#allocation2 + $0x170] sm:$0xff]
    %v145 = vld [vmem:[#allocation2 + $0x190] sm:$0xff]
    %v146 = vld [vmem:[#allocation2 + $0x198] sm:$0xff]
    %v147 = vld [vmem:[#allocation2 + $0x1b8] sm:$0xff]
    %v148 = vld [vmem:[#allocation2 + $0x1c0] sm:$0xff]
    %v149 = vld [vmem:[#allocation2 + $0x1e0] sm:$0xff]
    %v150 = vld [vmem:[#allocation2 + $0x1e8] sm:$0xff]
    %v151 = vld [vmem:[#allocation2 + $0x208] sm:$0xff]
    %v152 = vld [vmem:[#allocation2 + $0x210] sm:$0xff]
    %v153 = vld [vmem:[#allocation2 + $0x230] sm:$0xff]
    %v154 = vld [vmem:[#allocation2 + $0x238] sm:$0xff]
    %v155 = vld [vmem:[#allocation2 + $0x258] sm:$0xff]
    %v156 = vld [vmem:[#allocation2 + $0x260] sm:$0xff]
    %157 = vmatprep.subr.mxu0 %v156
    %158 = vmatpush1.msra.mxu0 %v155
    %159 = vmatprep.subr.mxu0 %v154
    %160 = vmatpush1.msra.mxu0 %v153
    %161 = vmatprep.subr.mxu0 %v152
    %162 = vmatpush1.msra.mxu0 %v151
    %163 = vmatprep.subr.mxu0 %v150
    %164 = vmatpush1.msra.mxu0 %v149
    %165 = vmatprep.subr.mxu0 %v148
    %166 = vmatpush1.msra.mxu0 %v147
    %167 = vmatprep.subr.mxu0 %v146
    %168 = vmatpush1.msra.mxu0 %v145
    %169 = vmatprep.subr.mxu0 %v144
    %170 = vmatpush1.msra.mxu0 %v143
    %171 = vmatprep.subr.mxu0 %v142
    %172 = vmatpush1.msra.mxu0 %v141
    %173 = vmatprep.subr.mxu0 %v140
    %174 = vmatpush1.msra.mxu0 %v139
    %175 = vmatprep.subr.mxu0 %v138
    %176 = vmatpush1.msra.mxu0 %v137
    %177 = vmatprep.subr.mxu0 %v136
    %178 = vmatpush1.msra.mxu0 %v135
    %179 = vmatprep.subr.mxu0 %v134
    %180 = vmatpush1.msra.mxu0 %v133
    %181 = vmatprep.subr.mxu0 %v132
    %182 = vmatpush1.msra.mxu0 %v131
    %183 = vmatprep.subr.mxu0 %v130
    %184 = vmatpush1.msra.mxu0 %v129
    %185 = vmatprep.subr.mxu0 %v128
    %186 = vmatpush1.msra.mxu0 %v127
    %187 = vmatprep.subr.mxu0 %v126
    %188 = vmatpush1.msra.mxu0 %v125
    %189 = vmatprep.subr.mxu0 0.0
    %190 = vmatpush2.msra.mxu0 0.0
    %191 = vmatprep.subr.mxu0 0.0
    %192 = vmatpush2.msra.mxu0 0.0
    %193 = vmatprep.subr.mxu0 0.0
    %194 = vmatpush2.msra.mxu0 0.0
    %195 = vmatprep.subr.mxu0 0.0
    %196 = vmatpush2.msra.mxu0 0.0
    %197 = vmatprep.subr.mxu0 0.0
    %198 = vmatpush2.msra.mxu0 0.0
    %199 = vmatprep.subr.mxu0 0.0
    %200 = vmatpush2.msra.mxu0 0.0
    %201 = vmatprep.subr.mxu0 0.0
    %202 = vmatpush2.msra.mxu0 0.0
    %203 = vmatprep.subr.mxu0 0.0
    %204 = vmatpush2.msra.mxu0 0.0
    %205 = vmatprep.subr.mxu0 0.0
    %206 = vmatpush2.msra.mxu0 0.0
    %207 = vmatprep.subr.mxu0 0.0
    %208 = vmatpush2.msra.mxu0 0.0
    %209 = vmatprep.subr.mxu0 0.0
    %210 = vmatpush2.msra.mxu0 0.0
    %211 = vmatprep.subr.mxu0 0.0
    %212 = vmatpush2.msra.mxu0 0.0
    %213 = vmatprep.subr.mxu0 0.0
    %214 = vmatpush2.msra.mxu0 0.0
    %215 = vmatprep.subr.mxu0 0.0
    %216 = vmatpush2.msra.mxu0 0.0
    %217 = vmatprep.subr.mxu0 0.0
    %218 = vmatpush2.msra.mxu0 0.0
    %219 = vmatprep.subr.mxu0 0.0
    %220 = vmatpush2.msra.mxu0 0.0
    %221 = vmatprep.mubr.f32.mxu0 0.0
    %222 = vmatmul.mubr.f32.gmra.mxu0 %v124
    %v223 = vpop.f32.mrf.mxu0
    %v224 = vadd.f32 0.0, %v223
    %v225 = vpop.f32.mrf.mxu0
    %v226 = vadd.f32 0.0, %v225
    %227 = vdwg.mxu0
    %229 = vset.pattern.permute.xlu0 0
    %230 = vperm.xlu0 %229, %v32
    %v231 = vpop.permute.xlu0 %230
    %v233 = vlaneseq
    %v234 = vshrl.u32 %v233, 7
    %v235 = vsub.s32 0, %v234
    %v236 = vrot.slane %v224, %v235
    %v237 = vmul.f32 %v231, %v236
    %238 = vset.pattern.permute.xlu0 1
    %239 = vperm.xlu0 %238, %v32
    %v240 = vpop.permute.xlu0 %239
    %v242 = vlaneseq
    %v243 = vshrl.u32 %v242, 7
    %v244 = vsub.s32 1, %v243
    %v245 = vrot.slane %v224, %v244
    %v246 = vmul.f32 %v240, %v245
    %v247 = vadd.f32 %v237, %v246
    %249 = vset.pattern.permute.xlu0 0
    %250 = vperm.xlu0 %249, %v33
    %v251 = vpop.permute.xlu0 %250
    %v253 = vlaneseq
    %v254 = vshrl.u32 %v253, 7
    %v255 = vsub.s32 0, %v254
    %v256 = vrot.slane %v226, %v255
    %v257 = vmul.f32 %v231, %v256
    %v258 = vmul.f32 %v251, %v256
    %vm261 = vcmask 1041408
    %v262 = vrot.slane %v257, 6
    %v263 = vrot.slane %v258, 6
    %v264 = vsel %vm261, %v262, %v263
    %v266 = vadd.f32 %v247, %v264
    %267 = vset.pattern.permute.xlu0 1
    %268 = vperm.xlu0 %267, %v33
    %v269 = vpop.permute.xlu0 %268
    %v271 = vlaneseq
    %v272 = vshrl.u32 %v271, 7
    %v273 = vsub.s32 1, %v272
    %v274 = vrot.slane %v226, %v273
    %v275 = vmul.f32 %v240, %v274
    %v276 = vmul.f32 %v269, %v274
    %v279 = vrot.slane %v275, 6
    %v280 = vrot.slane %v276, 6
    %v281 = vsel %vm261, %v279, %v280
    %v283 = vadd.f32 %v266, %v281
    %285 = vset.pattern.permute.xlu0 0
    %286 = vperm.xlu0 %285, %v34
    %v287 = vpop.permute.xlu0 %286
    %289 = vset.pattern.permute.xlu0 0
    %290 = vperm.xlu0 %289, %v35
    %v291 = vpop.permute.xlu0 %290
    %v292 = vrot.slane %v287, 6
    %v293 = vrot.slane %v291, 6
    %v294 = vsel %vm261, %v292, %v293
    %v296 = vadd.f32 %v283, %v294
    %v297 = vlaneseq
    %v298 = vshrl.u32 %v297, 7
    %v299 = vsub.s32 0, %v298
    %v300 = vrot.slane %v124, %v299
    %v301 = vmul.f32 %v251, %v300
    %v302 = vlaneseq
    %v303 = vshrl.u32 %v302, 7
    %v304 = vsub.s32 1, %v303
    %v305 = vrot.slane %v124, %v304
    %v306 = vmul.f32 %v269, %v305
    %v307 = vadd.f32 %v301, %v306
    %v309 = vrot.slane %v307, 4
    %v311 = vadd.f32 %v296, %v309
    %v312 = vxor.u32 %v311, 2147483648
    %v313 = vmul.f32 %v312, 1.442695
    %v314 = vpow.pop %v313
    %v315 = vadd.f32 %v314, 1.0
    %v316 = vrcp.pop %v315
    %v317 = vmul.f32 1.0, %v316
    %v319 = vrot.slane %v124, 6
    %v321 = vmul.f32 %v317, %v319
    %v323 = vlaneseq
    %v324 = vshrl.u32 %v323, 7
    %v325 = vsub.s32 2, %v324
    %v326 = vrot.slane %v321, %v325
    %v327 = vmul.f32 %v287, %v326
    %v329 = vrot.slane %v327, 4
    %v331 = vadd.f32 %v296, %v329
    %332 = vset.pattern.permute.xlu0 1
    %333 = vperm.xlu0 %332, %v34
    %v334 = vpop.permute.xlu0 %333
    %v336 = vlaneseq
    %v337 = vshrl.u32 %v336, 7
    %v338 = vsub.s32 3, %v337
    %v339 = vrot.slane %v321, %v338
    %v340 = vmul.f32 %v334, %v339
    %v342 = vrot.slane %v340, 4
    %v344 = vadd.f32 %v331, %v342
    %v345 = vtanh.pop %v344
    %v346 = vsub.f32 1.0, %v317
    %v347 = vmul.f32 %v346, %v124
    %v349 = vrot.slane %v345, 4
    %v351 = vmul.f32 %v317, %v349
    %v352 = vadd.f32 %v347, %v351
    %353 = vmatprep.subr.mxu0 %v156
    %354 = vmatpush1.msra.mxu0 %v155
    %355 = vmatprep.subr.mxu0 %v154
    %356 = vmatpush1.msra.mxu0 %v153
    %357 = vmatprep.subr.mxu0 %v152
    %358 = vmatpush1.msra.mxu0 %v151
    %359 = vmatprep.subr.mxu0 %v150
    %360 = vmatpush1.msra.mxu0 %v149
    %361 = vmatprep.subr.mxu0 %v148
    %362 = vmatpush1.msra.mxu0 %v147
    %363 = vmatprep.subr.mxu0 %v146
    %364 = vmatpush1.msra.mxu0 %v145
    %365 = vmatprep.subr.mxu0 %v144
    %366 = vmatpush1.msra.mxu0 %v143
    %367 = vmatprep.subr.mxu0 %v142
    %368 = vmatpush1.msra.mxu0 %v141
    %369 = vmatprep.subr.mxu0 %v140
    %370 = vmatpush1.msra.mxu0 %v139
    %371 = vmatprep.subr.mxu0 %v138
    %372 = vmatpush1.msra.mxu0 %v137
    %373 = vmatprep.subr.mxu0 %v136
    %374 = vmatpush1.msra.mxu0 %v135
    %375 = vmatprep.subr.mxu0 %v134
    %376 = vmatpush1.msra.mxu0 %v133
    %377 = vmatprep.subr.mxu0 %v132
    %378 = vmatpush1.msra.mxu0 %v131
    %379 = vmatprep.subr.mxu0 %v130
    %380 = vmatpush1.msra.mxu0 %v129
    %381 = vmatprep.subr.mxu0 %v128
    %382 = vmatpush1.msra.mxu0 %v127
    %383 = vmatprep.subr.mxu0 %v126
    %384 = vmatpush1.msra.mxu0 %v125
    %385 = vmatprep.subr.mxu0 0.0
    %386 = vmatpush2.msra.mxu0 0.0
    %387 = vmatprep.subr.mxu0 0.0
    %388 = vmatpush2.msra.mxu0 0.0
    %389 = vmatprep.subr.mxu0 0.0
    %390 = vmatpush2.msra.mxu0 0.0
    %391 = vmatprep.subr.mxu0 0.0
    %392 = vmatpush2.msra.mxu0 0.0
    %393 = vmatprep.subr.mxu0 0.0
    %394 = vmatpush2.msra.mxu0 0.0
    %395 = vmatprep.subr.mxu0 0.0
    %396 = vmatpush2.msra.mxu0 0.0
    %397 = vmatprep.subr.mxu0 0.0
    %398 = vmatpush2.msra.mxu0 0.0
    %399 = vmatprep.subr.mxu0 0.0
    %400 = vmatpush2.msra.mxu0 0.0
    %401 = vmatprep.subr.mxu0 0.0
    %402 = vmatpush2.msra.mxu0 0.0
    %403 = vmatprep.subr.mxu0 0.0
    %404 = vmatpush2.msra.mxu0 0.0
    %405 = vmatprep.subr.mxu0 0.0
    %406 = vmatpush2.msra.mxu0 0.0
    %407 = vmatprep.subr.mxu0 0.0
    %408 = vmatpush2.msra.mxu0 0.0
    %409 = vmatprep.subr.mxu0 0.0
    %410 = vmatpush2.msra.mxu0 0.0
    %411 = vmatprep.subr.mxu0 0.0
    %412 = vmatpush2.msra.mxu0 0.0
    %413 = vmatprep.subr.mxu0 0.0
    %414 = vmatpush2.msra.mxu0 0.0
    %415 = vmatprep.subr.mxu0 0.0
    %416 = vmatpush2.msra.mxu0 0.0
    %417 = vmatprep.mubr.f32.mxu0 0.0
    %418 = vmatmul.mubr.f32.gmra.mxu0 %v352
    %v419 = vpop.f32.mrf.mxu0
    %v420 = vadd.f32 0.0, %v419
    %v421 = vpop.f32.mrf.mxu0
    %v422 = vadd.f32 0.0, %v421
    %423 = vdwg.mxu0
    %v424 = vlaneseq
    %v425 = vshrl.u32 %v424, 7
    %v426 = vsub.s32 0, %v425
    %v427 = vrot.slane %v420, %v426
    %v428 = vmul.f32 %v231, %v427
    %v429 = vlaneseq
    %v430 = vshrl.u32 %v429, 7
    %v431 = vsub.s32 1, %v430
    %v432 = vrot.slane %v420, %v431
    %v433 = vmul.f32 %v240, %v432
    %v434 = vadd.f32 %v428, %v433
    %v435 = vlaneseq
    %v436 = vshrl.u32 %v435, 7
    %v437 = vsub.s32 0, %v436
    %v438 = vrot.slane %v422, %v437
    %v439 = vmul.f32 %v231, %v438
    %v440 = vmul.f32 %v251, %v438
    %v443 = vrot.slane %v439, 6
    %v444 = vrot.slane %v440, 6
    %v445 = vsel %vm261, %v443, %v444
    %v447 = vadd.f32 %v434, %v445
    %v448 = vlaneseq
    %v449 = vshrl.u32 %v448, 7
    %v450 = vsub.s32 1, %v449
    %v451 = vrot.slane %v422, %v450
    %v452 = vmul.f32 %v240, %v451
    %v453 = vmul.f32 %v269, %v451
    %v456 = vrot.slane %v452, 6
    %v457 = vrot.slane %v453, 6
    %v458 = vsel %vm261, %v456, %v457
    %v460 = vadd.f32 %v447, %v458
    %v461 = vadd.f32 %v460, %v294
    %v462 = vlaneseq
    %v463 = vshrl.u32 %v462, 7
    %v464 = vsub.s32 0, %v463
    %v465 = vrot.slane %v352, %v464
    %v466 = vmul.f32 %v251, %v465
    %v467 = vlaneseq
    %v468 = vshrl.u32 %v467, 7
    %v469 = vsub.s32 1, %v468
    %v470 = vrot.slane %v352, %v469
    %v471 = vmul.f32 %v269, %v470
    %v472 = vadd.f32 %v466, %v471
    %v474 = vrot.slane %v472, 4
    %v476 = vadd.f32 %v461, %v474
    %v477 = vxor.u32 %v476, 2147483648
    %v478 = vmul.f32 %v477, 1.442695
    %v479 = vpow.pop %v478
    %v480 = vadd.f32 %v479, 1.0
    %v481 = vrcp.pop %v480
    %v482 = vmul.f32 1.0, %v481
    %v484 = vrot.slane %v352, 6
    %v486 = vmul.f32 %v482, %v484
    %v487 = vlaneseq
    %v488 = vshrl.u32 %v487, 7
    %v489 = vsub.s32 2, %v488
    %v490 = vrot.slane %v486, %v489
    %v491 = vmul.f32 %v287, %v490
    %v493 = vrot.slane %v491, 4
    %v495 = vadd.f32 %v461, %v493
    %v496 = vlaneseq
    %v497 = vshrl.u32 %v496, 7
    %v498 = vsub.s32 3, %v497
    %v499 = vrot.slane %v486, %v498
    %v500 = vmul.f32 %v334, %v499
    %v502 = vrot.slane %v500, 4
    %v504 = vadd.f32 %v495, %v502
    %v505 = vtanh.pop %v504
    %v506 = vsub.f32 1.0, %v482
    %v507 = vmul.f32 %v506, %v352
    %v509 = vrot.slane %v505, 4
    %v511 = vmul.f32 %v482, %v509
    %v512 = vadd.f32 %v507, %v511
    %513 = vmatprep.subr.mxu0 %v156
    %514 = vmatpush1.msra.mxu0 %v155
    %515 = vmatprep.subr.mxu0 %v154
    %516 = vmatpush1.msra.mxu0 %v153
    %517 = vmatprep.subr.mxu0 %v152
    %518 = vmatpush1.msra.mxu0 %v151
    %519 = vmatprep.subr.mxu0 %v150
    %520 = vmatpush1.msra.mxu0 %v149
    %521 = vmatprep.subr.mxu0 %v148
    %522 = vmatpush1.msra.mxu0 %v147
    %523 = vmatprep.subr.mxu0 %v146
    %524 = vmatpush1.msra.mxu0 %v145
    %525 = vmatprep.subr.mxu0 %v144
    %526 = vmatpush1.msra.mxu0 %v143
    %527 = vmatprep.subr.mxu0 %v142
    %528 = vmatpush1.msra.mxu0 %v141
    %529 = vmatprep.subr.mxu0 %v140
    %530 = vmatpush1.msra.mxu0 %v139
    %531 = vmatprep.subr.mxu0 %v138
    %532 = vmatpush1.msra.mxu0 %v137
    %533 = vmatprep.subr.mxu0 %v136
    %534 = vmatpush1.msra.mxu0 %v135
    %535 = vmatprep.subr.mxu0 %v134
    %536 = vmatpush1.msra.mxu0 %v133
    %537 = vmatprep.subr.mxu0 %v132
    %538 = vmatpush1.msra.mxu0 %v131
    %539 = vmatprep.subr.mxu0 %v130
    %540 = vmatpush1.msra.mxu0 %v129
    %541 = vmatprep.subr.mxu0 %v128
    %542 = vmatpush1.msra.mxu0 %v127
    %543 = vmatprep.subr.mxu0 %v126
    %544 = vmatpush1.msra.mxu0 %v125
    %545 = vmatprep.subr.mxu0 0.0
    %546 = vmatpush2.msra.mxu0 0.0
    %547 = vmatprep.subr.mxu0 0.0
    %548 = vmatpush2.msra.mxu0 0.0
    %549 = vmatprep.subr.mxu0 0.0
    %550 = vmatpush2.msra.mxu0 0.0
    %551 = vmatprep.subr.mxu0 0.0
    %552 = vmatpush2.msra.mxu0 0.0
    %553 = vmatprep.subr.mxu0 0.0
    %554 = vmatpush2.msra.mxu0 0.0
    %555 = vmatprep.subr.mxu0 0.0
    %556 = vmatpush2.msra.mxu0 0.0
    %557 = vmatprep.subr.mxu0 0.0
    %558 = vmatpush2.msra.mxu0 0.0
    %559 = vmatprep.subr.mxu0 0.0
    %560 = vmatpush2.msra.mxu0 0.0
    %561 = vmatprep.subr.mxu0 0.0
    %562 = vmatpush2.msra.mxu0 0.0
    %563 = vmatprep.subr.mxu0 0.0
    %564 = vmatpush2.msra.mxu0 0.0
    %565 = vmatprep.subr.mxu0 0.0
    %566 = vmatpush2.msra.mxu0 0.0
    %567 = vmatprep.subr.mxu0 0.0
    %568 = vmatpush2.msra.mxu0 0.0
    %569 = vmatprep.subr.mxu0 0.0
    %570 = vmatpush2.msra.mxu0 0.0
    %571 = vmatprep.subr.mxu0 0.0
    %572 = vmatpush2.msra.mxu0 0.0
    %573 = vmatprep.subr.mxu0 0.0
    %574 = vmatpush2.msra.mxu0 0.0
    %575 = vmatprep.subr.mxu0 0.0
    %576 = vmatpush2.msra.mxu0 0.0
    %577 = vmatprep.mubr.f32.mxu0 0.0
    %578 = vmatmul.mubr.f32.gmra.mxu0 %v512
    %v579 = vpop.f32.mrf.mxu0
    %v580 = vadd.f32 0.0, %v579
    %v581 = vpop.f32.mrf.mxu0
    %v582 = vadd.f32 0.0, %v581
    %583 = vdwg.mxu0
    %v584 = vlaneseq
    %v585 = vshrl.u32 %v584, 7
    %v586 = vsub.s32 0, %v585
    %v587 = vrot.slane %v580, %v586
    %v588 = vmul.f32 %v231, %v587
    %v589 = vlaneseq
    %v590 = vshrl.u32 %v589, 7
    %v591 = vsub.s32 1, %v590
    %v592 = vrot.slane %v580, %v591
    %v593 = vmul.f32 %v240, %v592
    %v594 = vadd.f32 %v588, %v593
    %v595 = vlaneseq
    %v596 = vshrl.u32 %v595, 7
    %v597 = vsub.s32 0, %v596
    %v598 = vrot.slane %v582, %v597
    %v599 = vmul.f32 %v231, %v598
    %v600 = vmul.f32 %v251, %v598
    %v603 = vrot.slane %v599, 6
    %v604 = vrot.slane %v600, 6
    %v605 = vsel %vm261, %v603, %v604
    %v607 = vadd.f32 %v594, %v605
    %v608 = vlaneseq
    %v609 = vshrl.u32 %v608, 7
    %v610 = vsub.s32 1, %v609
    %v611 = vrot.slane %v582, %v610
    %v612 = vmul.f32 %v240, %v611
    %v613 = vmul.f32 %v269, %v611
    %v616 = vrot.slane %v612, 6
    %v617 = vrot.slane %v613, 6
    %v618 = vsel %vm261, %v616, %v617
    %v620 = vadd.f32 %v607, %v618
    %v621 = vadd.f32 %v620, %v294
    %v622 = vlaneseq
    %v623 = vshrl.u32 %v622, 7
    %v624 = vsub.s32 0, %v623
    %v625 = vrot.slane %v512, %v624
    %v626 = vmul.f32 %v251, %v625
    %v627 = vlaneseq
    %v628 = vshrl.u32 %v627, 7
    %v629 = vsub.s32 1, %v628
    %v630 = vrot.slane %v512, %v629
    %v631 = vmul.f32 %v269, %v630
    %v632 = vadd.f32 %v626, %v631
    %v634 = vrot.slane %v632, 4
    %v636 = vadd.f32 %v621, %v634
    %v637 = vxor.u32 %v636, 2147483648
    %v638 = vmul.f32 %v637, 1.442695
    %v639 = vpow.pop %v638
    %v640 = vadd.f32 %v639, 1.0
    %v641 = vrcp.pop %v640
    %v642 = vmul.f32 1.0, %v641
    %v644 = vrot.slane %v512, 6
    %v646 = vmul.f32 %v642, %v644
    %v647 = vlaneseq
    %v648 = vshrl.u32 %v647, 7
    %v649 = vsub.s32 2, %v648
    %v650 = vrot.slane %v646, %v649
    %v651 = vmul.f32 %v287, %v650
    %v653 = vrot.slane %v651, 4
    %v655 = vadd.f32 %v621, %v653
    %v656 = vlaneseq
    %v657 = vshrl.u32 %v656, 7
    %v658 = vsub.s32 3, %v657
    %v659 = vrot.slane %v646, %v658
    %v660 = vmul.f32 %v334, %v659
    %v662 = vrot.slane %v660, 4
    %v664 = vadd.f32 %v655, %v662
    %v665 = vtanh.pop %v664
    %v666 = vsub.f32 1.0, %v642
    %v667 = vmul.f32 %v666, %v512
    %v669 = vrot.slane %v665, 4
    %v671 = vmul.f32 %v642, %v669
    %v672 = vadd.f32 %v667, %v671
    %v673 = vlaneseq
    %v674 = vshrl.u32 %v673, 7
    %v675 = vsub.s32 0, %v674
    %v676 = vrot.slane %v672, %v675
    %v677 = vmul.f32 %v287, %v676
    %v678 = vlaneseq
    %v679 = vshrl.u32 %v678, 7
    %v680 = vsub.s32 1, %v679
    %v681 = vrot.slane %v672, %v680
    %v682 = vmul.f32 %v334, %v681
    %v683 = vadd.f32 %v677, %v682
    %v684 = vmul.f32 %v287, %v300
    %v686 = vrot.slane %v684, 2
    %v688 = vadd.f32 %v683, %v686
    %v689 = vmul.f32 %v334, %v305
    %v691 = vrot.slane %v689, 2
    %v693 = vadd.f32 %v688, %v691
    %v694 = vrot.slane %v291, 2
    %v696 = vadd.f32 %v693, %v694
    %v697 = vtanh.pop %v696
    %v698 = vld [vmem:[#allocation2 + $0x10] sm:$0xff]
    %v699 = vld [vmem:[#allocation2 + $0x18] sm:$0xff]
    %v700 = vld [vmem:[#allocation2 + $0x38] sm:$0xff]
    %v701 = vld [vmem:[#allocation2 + $0x40] sm:$0xff]
    %v702 = vld [vmem:[#allocation2 + $0x60] sm:$0xff]
    %v703 = vld [vmem:[#allocation2 + $0x68] sm:$0xff]
    %v704 = vld [vmem:[#allocation2 + $0x88] sm:$0xff]
    %v705 = vld [vmem:[#allocation2 + $0x90] sm:$0xff]
    %v706 = vld [vmem:[#allocation2 + $0xb0] sm:$0xff]
    %v707 = vld [vmem:[#allocation2 + $0xb8] sm:$0xff]
    %v708 = vld [vmem:[#allocation2 + $0xd8] sm:$0xff]
    %v709 = vld [vmem:[#allocation2 + $0xe0] sm:$0xff]
    %v710 = vld [vmem:[#allocation2 + $0x100] sm:$0xff]
    %v711 = vld [vmem:[#allocation2 + $0x108] sm:$0xff]
    %v712 = vld [vmem:[#allocation2 + $0x128] sm:$0xff]
    %v713 = vld [vmem:[#allocation2 + $0x130] sm:$0xff]
    %v714 = vld [vmem:[#allocation2 + $0x150] sm:$0xff]
    %v715 = vld [vmem:[#allocation2 + $0x158] sm:$0xff]
    %v716 = vld [vmem:[#allocation2 + $0x178] sm:$0xff]
    %v717 = vld [vmem:[#allocation2 + $0x180] sm:$0xff]
    %v718 = vld [vmem:[#allocation2 + $0x1a0] sm:$0xff]
    %v719 = vld [vmem:[#allocation2 + $0x1a8] sm:$0xff]
    %v720 = vld [vmem:[#allocation2 + $0x1c8] sm:$0xff]
    %v721 = vld [vmem:[#allocation2 + $0x1d0] sm:$0xff]
    %v722 = vld [vmem:[#allocation2 + $0x1f0] sm:$0xff]
    %v723 = vld [vmem:[#allocation2 + $0x1f8] sm:$0xff]
    %v724 = vld [vmem:[#allocation2 + $0x218] sm:$0xff]
    %v725 = vld [vmem:[#allocation2 + $0x220] sm:$0xff]
    %v726 = vld [vmem:[#allocation2 + $0x240] sm:$0xff]
    %v727 = vld [vmem:[#allocation2 + $0x248] sm:$0xff]
    %v728 = vld [vmem:[#allocation2 + $0x268] sm:$0xff]
    %v729 = vld [vmem:[#allocation2 + $0x270] sm:$0xff]
    %v731 = vrot.slane %v697, 2
    %733 = vmatprep.subr.mxu0 %v729
    %734 = vmatpush1.msra.mxu0 %v728
    %735 = vmatprep.subr.mxu0 %v727
    %736 = vmatpush1.msra.mxu0 %v726
    %737 = vmatprep.subr.mxu0 %v725
    %738 = vmatpush1.msra.mxu0 %v724
    %739 = vmatprep.subr.mxu0 %v723
    %740 = vmatpush1.msra.mxu0 %v722
    %741 = vmatprep.subr.mxu0 %v721
    %742 = vmatpush1.msra.mxu0 %v720
    %743 = vmatprep.subr.mxu0 %v719
    %744 = vmatpush1.msra.mxu0 %v718
    %745 = vmatprep.subr.mxu0 %v717
    %746 = vmatpush1.msra.mxu0 %v716
    %747 = vmatprep.subr.mxu0 %v715
    %748 = vmatpush1.msra.mxu0 %v714
    %749 = vmatprep.subr.mxu0 %v713
    %750 = vmatpush1.msra.mxu0 %v712
    %751 = vmatprep.subr.mxu0 %v711
    %752 = vmatpush1.msra.mxu0 %v710
    %753 = vmatprep.subr.mxu0 %v709
    %754 = vmatpush1.msra.mxu0 %v708
    %755 = vmatprep.subr.mxu0 %v707
    %756 = vmatpush1.msra.mxu0 %v706
    %757 = vmatprep.subr.mxu0 %v705
    %758 = vmatpush1.msra.mxu0 %v704
    %759 = vmatprep.subr.mxu0 %v703
    %760 = vmatpush1.msra.mxu0 %v702
    %761 = vmatprep.subr.mxu0 %v701
    %762 = vmatpush1.msra.mxu0 %v700
    %763 = vmatprep.subr.mxu0 %v699
    %764 = vmatpush1.msra.mxu0 %v698
    %765 = vmatprep.subr.mxu0 0.0
    %766 = vmatpush2.msra.mxu0 0.0
    %767 = vmatprep.subr.mxu0 0.0
    %768 = vmatpush2.msra.mxu0 0.0
    %769 = vmatprep.subr.mxu0 0.0
    %770 = vmatpush2.msra.mxu0 0.0
    %771 = vmatprep.subr.mxu0 0.0
    %772 = vmatpush2.msra.mxu0 0.0
    %773 = vmatprep.subr.mxu0 0.0
    %774 = vmatpush2.msra.mxu0 0.0
    %775 = vmatprep.subr.mxu0 0.0
    %776 = vmatpush2.msra.mxu0 0.0
    %777 = vmatprep.subr.mxu0 0.0
    %778 = vmatpush2.msra.mxu0 0.0
    %779 = vmatprep.subr.mxu0 0.0
    %780 = vmatpush2.msra.mxu0 0.0
    %781 = vmatprep.subr.mxu0 0.0
    %782 = vmatpush2.msra.mxu0 0.0
    %783 = vmatprep.subr.mxu0 0.0
    %784 = vmatpush2.msra.mxu0 0.0
    %785 = vmatprep.subr.mxu0 0.0
    %786 = vmatpush2.msra.mxu0 0.0
    %787 = vmatprep.subr.mxu0 0.0
    %788 = vmatpush2.msra.mxu0 0.0
    %789 = vmatprep.subr.mxu0 0.0
    %790 = vmatpush2.msra.mxu0 0.0
    %791 = vmatprep.subr.mxu0 0.0
    %792 = vmatpush2.msra.mxu0 0.0
    %793 = vmatprep.subr.mxu0 0.0
    %794 = vmatpush2.msra.mxu0 0.0
    %795 = vmatprep.subr.mxu0 0.0
    %796 = vmatpush2.msra.mxu0 0.0
    %797 = vmatprep.mubr.f32.mxu0 0.0
    %798 = vmatmul.mubr.f32.gmra.mxu0 %v731
    %v799 = vpop.f32.mrf.mxu0
    %v800 = vadd.f32 0.0, %v799
    %v801 = vpop.f32.mrf.mxu0
    %v802 = vadd.f32 0.0, %v801
    %803 = vdwg.mxu0
    %v805 = vrot.slane %v802, 1
    %v807 = vadd.f32 %v800, %v805
    %v808 = vrot.slane %v31, 4
    %v810 = vadd.f32 %v807, %v808
    %811 = vset.pattern.permute.xlu0 0
    %812 = vperm.xlu0 %811, %v697
    %v813 = vpop.permute.xlu0 %812
    %v815 = vmul.f32 %v813, %v40
    %v817 = vrot.slane %v815, 2
    %v819 = vadd.f32 %v810, %v817
    %v820 = vrot.slane %v815, 3
    %v822 = vadd.f32 %v819, %v820
    %823 = vset.pattern.permute.xlu0 1
    %824 = vperm.xlu0 %823, %v697
    %v825 = vpop.permute.xlu0 %824
    %v827 = vmul.f32 %v825, %v40
    %v829 = vrot.slane %v827, 2
    %v831 = vadd.f32 %v810, %v829
    %v832 = vrot.slane %v827, 3
    %v834 = vadd.f32 %v831, %v832
    %v836 = vrot.slane %v834, 7
    %v838 = vsel %vm123, %v822, %v836
    %v839 = vld [vmem:[#allocation2 + $0x20] sm:$0xff]
    %v840 = vld [vmem:[#allocation2 + $0x48] sm:$0xff]
    %v841 = vld [vmem:[#allocation2 + $0x70] sm:$0xff]
    %v842 = vld [vmem:[#allocation2 + $0x98] sm:$0xff]
    %v843 = vld [vmem:[#allocation2 + $0xc0] sm:$0xff]
    %v844 = vld [vmem:[#allocation2 + $0xe8] sm:$0xff]
    %v845 = vld [vmem:[#allocation2 + $0x110] sm:$0xff]
    %v846 = vld [vmem:[#allocation2 + $0x138] sm:$0xff]
    %v847 = vld [vmem:[#allocation2 + $0x160] sm:$0xff]
    %v848 = vld [vmem:[#allocation2 + $0x188] sm:$0xff]
    %v849 = vld [vmem:[#allocation2 + $0x1b0] sm:$0xff]
    %v850 = vld [vmem:[#allocation2 + $0x1d8] sm:$0xff]
    %v851 = vld [vmem:[#allocation2 + $0x200] sm:$0xff]
    %v852 = vld [vmem:[#allocation2 + $0x228] sm:$0xff]
    %v853 = vld [vmem:[#allocation2 + $0x250] sm:$0xff]
    %v854 = vld [vmem:[#allocation2 + $0x278] sm:$0xff]
    %v855 = vlaneseq
    %v856 = vshrl.u32 %v855, 7
    %v857 = vsub.s32 7, %v856
    %v858 = vrot.slane %v31, %v857
    %859 = vmatprep.subr.mxu0 0.0
    %860 = vmatpush1.msra.mxu0 %v854
    %861 = vmatprep.subr.mxu0 0.0
    %862 = vmatpush1.msra.mxu0 %v853
    %863 = vmatprep.subr.mxu0 0.0
    %864 = vmatpush1.msra.mxu0 %v852
    %865 = vmatprep.subr.mxu0 0.0
    %866 = vmatpush1.msra.mxu0 %v851
    %867 = vmatprep.subr.mxu0 0.0
    %868 = vmatpush1.msra.mxu0 %v850
    %869 = vmatprep.subr.mxu0 0.0
    %870 = vmatpush1.msra.mxu0 %v849
    %871 = vmatprep.subr.mxu0 0.0
    %872 = vmatpush1.msra.mxu0 %v848
    %873 = vmatprep.subr.mxu0 0.0
    %874 = vmatpush1.msra.mxu0 %v847
    %875 = vmatprep.subr.mxu0 0.0
    %876 = vmatpush1.msra.mxu0 %v846
    %877 = vmatprep.subr.mxu0 0.0
    %878 = vmatpush1.msra.mxu0 %v845
    %879 = vmatprep.subr.mxu0 0.0
    %880 = vmatpush1.msra.mxu0 %v844
    %881 = vmatprep.subr.mxu0 0.0
    %882 = vmatpush1.msra.mxu0 %v843
    %883 = vmatprep.subr.mxu0 0.0
    %884 = vmatpush1.msra.mxu0 %v842
    %885 = vmatprep.subr.mxu0 0.0
    %886 = vmatpush1.msra.mxu0 %v841
    %887 = vmatprep.subr.mxu0 0.0
    %888 = vmatpush1.msra.mxu0 %v840
    %889 = vmatprep.subr.mxu0 0.0
    %890 = vmatpush1.msra.mxu0 %v839
    %891 = vmatprep.subr.mxu0 0.0
    %892 = vmatpush2.msra.mxu0 0.0
    %893 = vmatprep.subr.mxu0 0.0
    %894 = vmatpush2.msra.mxu0 0.0
    %895 = vmatprep.subr.mxu0 0.0
    %896 = vmatpush2.msra.mxu0 0.0
    %897 = vmatprep.subr.mxu0 0.0
    %898 = vmatpush2.msra.mxu0 0.0
    %899 = vmatprep.subr.mxu0 0.0
    %900 = vmatpush2.msra.mxu0 0.0
    %901 = vmatprep.subr.mxu0 0.0
    %902 = vmatpush2.msra.mxu0 0.0
    %903 = vmatprep.subr.mxu0 0.0
    %904 = vmatpush2.msra.mxu0 0.0
    %905 = vmatprep.subr.mxu0 0.0
    %906 = vmatpush2.msra.mxu0 0.0
    %907 = vmatprep.subr.mxu0 0.0
    %908 = vmatpush2.msra.mxu0 0.0
    %909 = vmatprep.subr.mxu0 0.0
    %910 = vmatpush2.msra.mxu0 0.0
    %911 = vmatprep.subr.mxu0 0.0
    %912 = vmatpush2.msra.mxu0 0.0
    %913 = vmatprep.subr.mxu0 0.0
    %914 = vmatpush2.msra.mxu0 0.0
    %915 = vmatprep.subr.mxu0 0.0
    %916 = vmatpush2.msra.mxu0 0.0
    %917 = vmatprep.subr.mxu0 0.0
    %918 = vmatpush2.msra.mxu0 0.0
    %919 = vmatprep.subr.mxu0 0.0
    %920 = vmatpush2.msra.mxu0 0.0
    %921 = vmatprep.subr.mxu0 0.0
    %922 = vmatpush2.msra.mxu0 0.0
    %923 = vmatprep.mubr.f32.mxu0 0.0
    %924 = vmatmul.mubr.f32.gmra.mxu0 %v838
    %v925 = vpop.f32.mrf.mxu0
    %v926 = vadd.f32 %v858, %v925
    %v927 = vpop.f32.mrf.mxu0
    %928 = vdwg.mxu0
    %v929 = vmax.f32 %v926, 0.0
    %v930 = vlaneseq
    %v931 = vshrl.u32 %v930, 7
    %v932 = vsub.s32 6, %v931
    %v933 = vrot.slane %v35, %v932
    %v934 = vmul.f32 %v929, %v933
    %v935 = vlaneseq
    %v936 = vshrl.u32 %v935, 7
    %v937 = vsub.s32 7, %v936
    %v938 = vrot.slane %v35, %v937
    %940 = vrot.lane.b32.xlu0 %v938, 1
    %v941 = vpop.permute.xlu0 %940
    %v943 = vmul.f32 %v929, %v941
    %945 = vrot.lane.b32.xlu0 %v943, 127
    %v946 = vpop.permute.xlu0 %945
    %v948 = vadd.f32 %v934, %v946
    %v949 = vlaneseq
    %v950 = vshrl.u32 %v949, 7
    %v951 = vsub.s32 0, %v950
    %v952 = vrot.slane %v36, %v951
    %v953 = vadd.f32 %v948, %v952
    %955 = vset.pattern.permute.xlu0 0
    %956 = vperm.xlu0 %955, %v953
    %v957 = vpop.permute.xlu0 %956
    %959 = vst [vmem:[%s4] sm:$0x3] %v957
    // Predicated region
    $region22: #{gpa_forward.1} parent=1 // pred_check
      _
    $region23: #{gpa_forward.1} parent=1 // pred_check_branch
      %961 = sbr.rel (0) target = $region25
    $region24: #{gpa_forward.1} parent=1 // pred_region
      _
    $region25: #{gpa_forward.1} parent=1 // pred_fallthru
      _
    // Predicated region
    $region26: #{gpa_forward.1} parent=1 // pred_check
      _
    $region27: #{gpa_forward.1} parent=1 // pred_check_branch
      %963 = sbr.rel (0) target = $region29
    $region28: #{gpa_forward.1} parent=1 // pred_region
      _
    $region29: #{gpa_forward.1} parent=1 // pred_fallthru
      _
    %964 = vsyncpa [#allocation3], 1

</llo_original>
